<compile_context>
chip_gen: v7x
topology: tpu7x:2x2x1
jax: 0.10.0
libtpu: 0.0.40
codegen_flags: <defaults>
</compile_context>

<pallas_src>
import jax
import jax.numpy as jnp
from jax.experimental import pallas as pl
from jax.experimental.pallas import tpu as pltpu

NUM_CLASSES = 35
KW = 6            # kernel width of both classifiers
C3_OFF = 4        # classifier3 consumes x[:, :, :, 4:]
C3_STRIDE = 3     # classifier3 stride along W
_MXU_MIN_C = 64   # below this, the tap contraction runs on the VPU (pure f32)


def _make_green_ocr_kernel(bb, t3, use_mxu):
    """Build a kernel specialized for (batch block, #stride-3 columns, path)."""

    def kernel(x_ref, wcat_ref, bcat_ref, o_ref, *scratch):
        # x_ref   : (BB, C, W)        f32   activation block
        # wcat_ref: (KW, 70, C)       bf16 (MXU path) / f32 (VPU path)
        #                              rows 0:35 = classifier1 taps,
        #                              rows 35:70 = classifier3 taps
        # bcat_ref: (70, 1)           f32   stacked biases (b1; b3)
        # o_ref   : (BB, 35, 1+T3)    f32   col 0 = classifier1,
        #                                   cols 1.. = classifier3 (stride 3)
        # scratch : (BB, C, W) bf16 VMEM scratch (MXU path only)
        _, c_dim, w_dim = x_ref.shape
        wd = w_dim - KW + 1            # dense stride-1 positions over full W
        nc2 = 2 * NUM_CLASSES

        if use_mxu:
            xbf_ref, = scratch
            # Hoisted f32 -> bf16 cast: once per grid step instead of once per
            # tap (6x fewer cast ops, bf16 instead of f32 per-tap loads).
            xbf_ref[...] = x_ref[...].astype(jnp.bfloat16)

        # Hoisted bias broadcast (JAX does not CSE broadcast_in_dim in loops).
        bias_slab = jnp.broadcast_to(bcat_ref[...], (nc2, wd))

        for b in range(bb):                      # BB is small: static unroll
            acc = bias_slab                      # (70, Wd) f32, bias-initialized
            if use_mxu:
                # 6 dense dots (70, C) x (C, Wd); classifier1 shares them.
                for k in range(KW):
                    xk = xbf_ref[b, :, pl.ds(k, wd)]           # (C, Wd) bf16
                    acc = acc + jnp.dot(wcat_ref[k], xk,
                                        preferred_element_type=jnp.float32)
            else:
                # Small C: VPU broadcast-FMA, fully f32 (no MXU, no bf16).
                xb = x_ref[b]                                   # (C, W) f32
                for k in range(KW):
                    for c in range(c_dim):
                        acc = acc + (wcat_ref[k, :, c:c + 1]     # (70, 1)
                                     * xb[c:c + 1, k:k + wd])    # (1, Wd)

            # Merged, in-kernel stride-3 subsampled store:
            #   column 0      <- dense position 0 of the classifier1 rows
            #   column 1 + t  <- dense position 4 + 3t of the classifier3 rows
            # (unit-lane VMEM stores into the resident output block; only the
            #  T3 selected columns ever reach HBM.)
            o_ref[b, :, 0:1] = acc[:NUM_CLASSES, 0:1]
            for t in range(t3):
                p = C3_OFF + C3_STRIDE * t
                o_ref[b, :, 1 + t:2 + t] = acc[NUM_CLASSES:, p:p + 1]

    return kernel


def _step_vmem_bytes(bb, c, w, t, use_mxu):
    """Rough per-grid-step VMEM estimate (double-buffered in/out blocks)."""
    x_in = 2 * bb * c * w * 4                       # f32 input stream
    x_bf = bb * c * w * 2 if use_mxu else 0         # bf16 scratch
    outb = 2 * bb * NUM_CLASSES * t * 4             # merged output
    wbytes = 2 * (KW * 2 * NUM_CLASSES * c * (2 if use_mxu else 4)
                  + 2 * NUM_CLASSES * 4)            # resident weights/biases
    return x_in + x_bf + outb + wbytes


def green_ocr_forward(x, w1, b1, w3, b3):
    """Pallas forward of Green_ocr.

    x  : (B, C, 1, W) float32, NCHW (H must be 1 — forward() squeezes dim 2)
    w1 : (35, C, 1, 6), b1: (35,)   -- classifier1, stride 1 over x[..., :6]
    w3 : (35, C, 1, 6), b3: (35,)   -- classifier3, stride 3 over x[..., 4:]
    returns (B, T, 35) with T = 1 + ((W - 4 - 6)//3 + 1)
    """
    B, C, H, W = x.shape
    assert H == 1, "Green_ocr.forward squeezes dim 2; requires H == 1"
    assert W >= C3_OFF + KW, "need W >= 10 for at least one classifier3 window"

    T3 = (W - C3_OFF - KW) // C3_STRIDE + 1         # torch floor conv arithmetic
    T = 1 + T3
    use_mxu = C >= _MXU_MIN_C

    # ---- batch block size --------------------------------------------------
    # Keep >= 2 grid steps when possible (v7x: 2 TCs share the parallel axis),
    # cap the in-kernel unroll, and keep per-step VMEM well under the v7x
    # scoped budget (64 MiB physical / 32 MiB scoped default).
    unroll_cap = 8 if use_mxu else max(1, min(8, 512 // (KW * C)))
    bb = max(1, min(unroll_cap, (B + 1) // 2)) if B >= 2 else 1
    VMEM_BUDGET = 24 * 1024 * 1024
    while bb > 1 and _step_vmem_bytes(bb, C, W, T, use_mxu) > VMEM_BUDGET:
        bb -= 1
    grid = int(pl.cdiv(B, bb))
    B_pad = grid * bb

    # ---- operand prep (weight/output sized; no im2col, no x duplication) ---
    xw = x[:, :, 0, :].astype(jnp.float32)                      # (B, C, W)
    if B_pad != B:                                              # B % bb != 0
        xw = jnp.concatenate(
            [xw, jnp.zeros((B_pad - B, C, W), jnp.float32)], axis=0)

    # torch OIHW (35, C, 1, 6) -> stacked per-tap (KW, 70, C)
    w_dtype = jnp.bfloat16 if use_mxu else jnp.float32
    wcat = jnp.concatenate([w1.reshape(NUM_CLASSES, C, KW),
                            w3.reshape(NUM_CLASSES, C, KW)], axis=0)   # (70,C,6)
    wcat = jnp.transpose(wcat, (2, 0, 1)).astype(w_dtype)              # (6,70,C)
    bcat = jnp.concatenate([b1, b3]).reshape(2 * NUM_CLASSES, 1).astype(jnp.float32)

    scratch_shapes = ([pltpu.VMEM((bb, C, W), jnp.bfloat16)] if use_mxu else [])
    vmem_limit = int(min(32 * 1024 * 1024,
                         max(4 * 1024 * 1024,
                             4 * _step_vmem_bytes(bb, C, W, T, use_mxu))))

    out_t = pl.pallas_call(
        _make_green_ocr_kernel(bb, T3, use_mxu),
        grid=(grid,),
        out_shape=jax.ShapeDtypeStruct((B_pad, NUM_CLASSES, T), jnp.float32),
        in_specs=[
            pl.BlockSpec((bb, C, W), lambda g: (g, 0, 0)),                # x stream
            pl.BlockSpec((KW, 2 * NUM_CLASSES, C), lambda g: (0, 0, 0)),  # weights (resident)
            pl.BlockSpec((2 * NUM_CLASSES, 1), lambda g: (0, 0)),         # biases (resident)
        ],
        out_specs=pl.BlockSpec((bb, NUM_CLASSES, T), lambda g: (g, 0, 0)),
        scratch_shapes=scratch_shapes,
        compiler_params=pltpu.CompilerParams(
            dimension_semantics=("parallel",),
            vmem_limit_bytes=vmem_limit),
    )(xw, wcat, bcat)

    out_t = out_t[:B]                              # drop batch padding
    return jnp.transpose(out_t, (0, 2, 1))         # (B, T, 35) — torch layout


def _reference_forward(x, w1, b1, w3, b3):
    """Pure-JAX f32 reference mirroring the PyTorch forward (for self-check)."""
    x1 = x[:, :, :, :KW]
    x3 = x[:, :, :, C3_OFF:]

    def conv1x6(inp, w, b, stride):
        Win = inp.shape[-1]
        Tout = (Win - KW) // stride + 1
        cols = []
        for t in range(Tout):
            win = inp[:, :, :, t * stride:t * stride + KW]      # (B,C,H,6)
            o = jnp.einsum('bchk,ochk->boh', win, w) + b[None, :, None]
            cols.append(o[..., None])
        return jnp.concatenate(cols, axis=-1)                   # (B,35,H,Tout)

    out1 = conv1x6(x1, w1, b1, 1)
    out3 = conv1x6(x3, w3, b3, C3_STRIDE)
    out = jnp.concatenate((out1, out3), axis=-1)[:, :, 0, :]    # squeeze(2)
    return jnp.transpose(out, (0, 2, 1))                        # permute(0,2,1)


if __name__ == "__main__":
    key = jax.random.PRNGKey(0)
    kx, kw1, kb1, kw3, kb3 = jax.random.split(key, 5)

    B, C, H, W = 2, 4, 1, 16          # H must be 1 (module squeezes dim 2)
    x = jax.random.normal(kx, (B, C, H, W), dtype=jnp.float32)

    # Deterministic synthetic parameters (Conv2d(C, 35, (1,6)) shapes).
    w1 = jax.random.normal(kw1, (NUM_CLASSES, C, 1, KW), jnp.float32) * 0.1
    b1 = jax.random.normal(kb1, (NUM_CLASSES,), jnp.float32) * 0.1
    w3 = jax.random.normal(kw3, (NUM_CLASSES, C, 1, KW), jnp.float32) * 0.1
    b3 = jax.random.normal(kb3, (NUM_CLASSES,), jnp.float32) * 0.1

    out = green_ocr_forward(x, w1, b1, w3, b3)
    out = jax.block_until_ready(out)

    ref = _reference_forward(x, w1, b1, w3, b3)
    T = 1 + ((W - C3_OFF - KW) // C3_STRIDE + 1)
    assert out.shape == ref.shape == (B, T, NUM_CLASSES), (out.shape, ref.shape)
    # Small-C path is pure f32 (tight tolerance); large-C path uses bf16 MXU
    # operands with f32 accumulation (looser tolerance, documented).
    tol = 2e-2 if C >= _MXU_MIN_C else 1e-3
    assert jnp.allclose(out, ref, rtol=tol, atol=tol), "mismatch vs reference"

    print("KERNEL_OK")
</pallas_src>

<mosaic_0001>
module attributes {stable_mosaic.version = 11 : i64} {
  func.func @kernel(%arg0: i32, %arg1: memref<1x4x16xf32, #tpu.memory_space<vmem>>, %arg2: memref<6x70x4xf32, #tpu.memory_space<vmem>>, %arg3: memref<70x1xf32, #tpu.memory_space<vmem>>, %arg4: memref<1x35x4xf32, #tpu.memory_space<vmem>>) attributes {dimension_semantics = [#tpu.dimension_semantics<parallel>], iteration_bounds = array<i64: 2>, scalar_prefetch = 0 : i64, scratch_operands = 0 : i64, tpu.core_type = #tpu.core_type<tc>, window_params = [{transform_indices = @transform_0, window_bounds = array<i64: 1, 4, 16>}, {pipeline_mode = #tpu.pipeline_mode<synchronous>, transform_indices = @transform_1, window_bounds = array<i64: 6, 70, 4>}, {pipeline_mode = #tpu.pipeline_mode<synchronous>, transform_indices = @transform_2, window_bounds = array<i64: 70, 1>}, {transform_indices = @transform_3, window_bounds = array<i64: 1, 35, 4>}]} {
    %c0 = arith.constant 0 : index
    %c0_0 = arith.constant 0 : index
    %0 = vector.load %arg3[%c0, %c0_0] : memref<70x1xf32, #tpu.memory_space<vmem>>, vector<70x1xf32>
    %1 = vector.shape_cast %0 : vector<70x1xf32> to vector<70x1xf32>
    %2 = vector.broadcast %1 : vector<70x1xf32> to vector<70x11xf32>
    %c0_1 = arith.constant 0 : index
    %c0_2 = arith.constant 0 : index
    %c0_3 = arith.constant 0 : index
    %3 = vector.load %arg1[%c0_1, %c0_2, %c0_3] : memref<1x4x16xf32, #tpu.memory_space<vmem>>, vector<1x4x16xf32>
    %4 = vector.shape_cast %3 : vector<1x4x16xf32> to vector<4x16xf32>
    %c0_4 = arith.constant 0 : index
    %c0_5 = arith.constant 0 : index
    %c0_6 = arith.constant 0 : index
    %5 = vector.load %arg2[%c0_4, %c0_5, %c0_6] : memref<6x70x4xf32, #tpu.memory_space<vmem>>, vector<1x70x1xf32>
    %6 = vector.shape_cast %5 : vector<1x70x1xf32> to vector<70x1xf32>
    %7 = vector.extract_strided_slice %4 {offsets = [0, 0], sizes = [1, 11], strides = [1, 1]} : vector<4x16xf32> to vector<1x11xf32>
    %8 = vector.broadcast %6 : vector<70x1xf32> to vector<70x11xf32>
    %9 = vector.broadcast %7 : vector<1x11xf32> to vector<70x11xf32>
    %10 = arith.mulf %8, %9 : vector<70x11xf32>
    %11 = arith.addf %2, %10 : vector<70x11xf32>
    %c0_7 = arith.constant 0 : index
    %c0_8 = arith.constant 0 : index
    %c1 = arith.constant 1 : index
    %12 = vector.load %arg2[%c0_7, %c0_8, %c1] : memref<6x70x4xf32, #tpu.memory_space<vmem>>, vector<1x70x1xf32>
    %13 = vector.shape_cast %12 : vector<1x70x1xf32> to vector<70x1xf32>
    %14 = vector.extract_strided_slice %4 {offsets = [1, 0], sizes = [1, 11], strides = [1, 1]} : vector<4x16xf32> to vector<1x11xf32>
    %15 = vector.broadcast %13 : vector<70x1xf32> to vector<70x11xf32>
    %16 = vector.broadcast %14 : vector<1x11xf32> to vector<70x11xf32>
    %17 = arith.mulf %15, %16 : vector<70x11xf32>
    %18 = arith.addf %11, %17 : vector<70x11xf32>
    %c0_9 = arith.constant 0 : index
    %c0_10 = arith.constant 0 : index
    %c2 = arith.constant 2 : index
    %19 = vector.load %arg2[%c0_9, %c0_10, %c2] : memref<6x70x4xf32, #tpu.memory_space<vmem>>, vector<1x70x1xf32>
    %20 = vector.shape_cast %19 : vector<1x70x1xf32> to vector<70x1xf32>
    %21 = vector.extract_strided_slice %4 {offsets = [2, 0], sizes = [1, 11], strides = [1, 1]} : vector<4x16xf32> to vector<1x11xf32>
    %22 = vector.broadcast %20 : vector<70x1xf32> to vector<70x11xf32>
    %23 = vector.broadcast %21 : vector<1x11xf32> to vector<70x11xf32>
    %24 = arith.mulf %22, %23 : vector<70x11xf32>
    %25 = arith.addf %18, %24 : vector<70x11xf32>
    %c0_11 = arith.constant 0 : index
    %c0_12 = arith.constant 0 : index
    %c3 = arith.constant 3 : index
    %26 = vector.load %arg2[%c0_11, %c0_12, %c3] : memref<6x70x4xf32, #tpu.memory_space<vmem>>, vector<1x70x1xf32>
    %27 = vector.shape_cast %26 : vector<1x70x1xf32> to vector<70x1xf32>
    %28 = vector.extract_strided_slice %4 {offsets = [3, 0], sizes = [1, 11], strides = [1, 1]} : vector<4x16xf32> to vector<1x11xf32>
    %29 = vector.broadcast %27 : vector<70x1xf32> to vector<70x11xf32>
    %30 = vector.broadcast %28 : vector<1x11xf32> to vector<70x11xf32>
    %31 = arith.mulf %29, %30 : vector<70x11xf32>
    %32 = arith.addf %25, %31 : vector<70x11xf32>
    %c1_13 = arith.constant 1 : index
    %c0_14 = arith.constant 0 : index
    %c0_15 = arith.constant 0 : index
    %33 = vector.load %arg2[%c1_13, %c0_14, %c0_15] : memref<6x70x4xf32, #tpu.memory_space<vmem>>, vector<1x70x1xf32>
    %34 = vector.shape_cast %33 : vector<1x70x1xf32> to vector<70x1xf32>
    %35 = vector.extract_strided_slice %4 {offsets = [0, 1], sizes = [1, 11], strides = [1, 1]} : vector<4x16xf32> to vector<1x11xf32>
    %36 = vector.broadcast %34 : vector<70x1xf32> to vector<70x11xf32>
    %37 = vector.broadcast %35 : vector<1x11xf32> to vector<70x11xf32>
    %38 = arith.mulf %36, %37 : vector<70x11xf32>
    %39 = arith.addf %32, %38 : vector<70x11xf32>
    %c1_16 = arith.constant 1 : index
    %c0_17 = arith.constant 0 : index
    %c1_18 = arith.constant 1 : index
    %40 = vector.load %arg2[%c1_16, %c0_17, %c1_18] : memref<6x70x4xf32, #tpu.memory_space<vmem>>, vector<1x70x1xf32>
    %41 = vector.shape_cast %40 : vector<1x70x1xf32> to vector<70x1xf32>
    %42 = vector.extract_strided_slice %4 {offsets = [1, 1], sizes = [1, 11], strides = [1, 1]} : vector<4x16xf32> to vector<1x11xf32>
    %43 = vector.broadcast %41 : vector<70x1xf32> to vector<70x11xf32>
    %44 = vector.broadcast %42 : vector<1x11xf32> to vector<70x11xf32>
    %45 = arith.mulf %43, %44 : vector<70x11xf32>
    %46 = arith.addf %39, %45 : vector<70x11xf32>
    %c1_19 = arith.constant 1 : index
    %c0_20 = arith.constant 0 : index
    %c2_21 = arith.constant 2 : index
    %47 = vector.load %arg2[%c1_19, %c0_20, %c2_21] : memref<6x70x4xf32, #tpu.memory_space<vmem>>, vector<1x70x1xf32>
    %48 = vector.shape_cast %47 : vector<1x70x1xf32> to vector<70x1xf32>
    %49 = vector.extract_strided_slice %4 {offsets = [2, 1], sizes = [1, 11], strides = [1, 1]} : vector<4x16xf32> to vector<1x11xf32>
    %50 = vector.broadcast %48 : vector<70x1xf32> to vector<70x11xf32>
    %51 = vector.broadcast %49 : vector<1x11xf32> to vector<70x11xf32>
    %52 = arith.mulf %50, %51 : vector<70x11xf32>
    %53 = arith.addf %46, %52 : vector<70x11xf32>
    %c1_22 = arith.constant 1 : index
    %c0_23 = arith.constant 0 : index
    %c3_24 = arith.constant 3 : index
    %54 = vector.load %arg2[%c1_22, %c0_23, %c3_24] : memref<6x70x4xf32, #tpu.memory_space<vmem>>, vector<1x70x1xf32>
    %55 = vector.shape_cast %54 : vector<1x70x1xf32> to vector<70x1xf32>
    %56 = vector.extract_strided_slice %4 {offsets = [3, 1], sizes = [1, 11], strides = [1, 1]} : vector<4x16xf32> to vector<1x11xf32>
    %57 = vector.broadcast %55 : vector<70x1xf32> to vector<70x11xf32>
    %58 = vector.broadcast %56 : vector<1x11xf32> to vector<70x11xf32>
    %59 = arith.mulf %57, %58 : vector<70x11xf32>
    %60 = arith.addf %53, %59 : vector<70x11xf32>
    %c2_25 = arith.constant 2 : index
    %c0_26 = arith.constant 0 : index
    %c0_27 = arith.constant 0 : index
    %61 = vector.load %arg2[%c2_25, %c0_26, %c0_27] : memref<6x70x4xf32, #tpu.memory_space<vmem>>, vector<1x70x1xf32>
    %62 = vector.shape_cast %61 : vector<1x70x1xf32> to vector<70x1xf32>
    %63 = vector.extract_strided_slice %4 {offsets = [0, 2], sizes = [1, 11], strides = [1, 1]} : vector<4x16xf32> to vector<1x11xf32>
    %64 = vector.broadcast %62 : vector<70x1xf32> to vector<70x11xf32>
    %65 = vector.broadcast %63 : vector<1x11xf32> to vector<70x11xf32>
    %66 = arith.mulf %64, %65 : vector<70x11xf32>
    %67 = arith.addf %60, %66 : vector<70x11xf32>
    %c2_28 = arith.constant 2 : index
    %c0_29 = arith.constant 0 : index
    %c1_30 = arith.constant 1 : index
    %68 = vector.load %arg2[%c2_28, %c0_29, %c1_30] : memref<6x70x4xf32, #tpu.memory_space<vmem>>, vector<1x70x1xf32>
    %69 = vector.shape_cast %68 : vector<1x70x1xf32> to vector<70x1xf32>
    %70 = vector.extract_strided_slice %4 {offsets = [1, 2], sizes = [1, 11], strides = [1, 1]} : vector<4x16xf32> to vector<1x11xf32>
    %71 = vector.broadcast %69 : vector<70x1xf32> to vector<70x11xf32>
    %72 = vector.broadcast %70 : vector<1x11xf32> to vector<70x11xf32>
    %73 = arith.mulf %71, %72 : vector<70x11xf32>
    %74 = arith.addf %67, %73 : vector<70x11xf32>
    %c2_31 = arith.constant 2 : index
    %c0_32 = arith.constant 0 : index
    %c2_33 = arith.constant 2 : index
    %75 = vector.load %arg2[%c2_31, %c0_32, %c2_33] : memref<6x70x4xf32, #tpu.memory_space<vmem>>, vector<1x70x1xf32>
    %76 = vector.shape_cast %75 : vector<1x70x1xf32> to vector<70x1xf32>
    %77 = vector.extract_strided_slice %4 {offsets = [2, 2], sizes = [1, 11], strides = [1, 1]} : vector<4x16xf32> to vector<1x11xf32>
    %78 = vector.broadcast %76 : vector<70x1xf32> to vector<70x11xf32>
    %79 = vector.broadcast %77 : vector<1x11xf32> to vector<70x11xf32>
    %80 = arith.mulf %78, %79 : vector<70x11xf32>
    %81 = arith.addf %74, %80 : vector<70x11xf32>
    %c2_34 = arith.constant 2 : index
    %c0_35 = arith.constant 0 : index
    %c3_36 = arith.constant 3 : index
    %82 = vector.load %arg2[%c2_34, %c0_35, %c3_36] : memref<6x70x4xf32, #tpu.memory_space<vmem>>, vector<1x70x1xf32>
    %83 = vector.shape_cast %82 : vector<1x70x1xf32> to vector<70x1xf32>
    %84 = vector.extract_strided_slice %4 {offsets = [3, 2], sizes = [1, 11], strides = [1, 1]} : vector<4x16xf32> to vector<1x11xf32>
    %85 = vector.broadcast %83 : vector<70x1xf32> to vector<70x11xf32>
    %86 = vector.broadcast %84 : vector<1x11xf32> to vector<70x11xf32>
    %87 = arith.mulf %85, %86 : vector<70x11xf32>
    %88 = arith.addf %81, %87 : vector<70x11xf32>
    %c3_37 = arith.constant 3 : index
    %c0_38 = arith.constant 0 : index
    %c0_39 = arith.constant 0 : index
    %89 = vector.load %arg2[%c3_37, %c0_38, %c0_39] : memref<6x70x4xf32, #tpu.memory_space<vmem>>, vector<1x70x1xf32>
    %90 = vector.shape_cast %89 : vector<1x70x1xf32> to vector<70x1xf32>
    %91 = vector.extract_strided_slice %4 {offsets = [0, 3], sizes = [1, 11], strides = [1, 1]} : vector<4x16xf32> to vector<1x11xf32>
    %92 = vector.broadcast %90 : vector<70x1xf32> to vector<70x11xf32>
    %93 = vector.broadcast %91 : vector<1x11xf32> to vector<70x11xf32>
    %94 = arith.mulf %92, %93 : vector<70x11xf32>
    %95 = arith.addf %88, %94 : vector<70x11xf32>
    %c3_40 = arith.constant 3 : index
    %c0_41 = arith.constant 0 : index
    %c1_42 = arith.constant 1 : index
    %96 = vector.load %arg2[%c3_40, %c0_41, %c1_42] : memref<6x70x4xf32, #tpu.memory_space<vmem>>, vector<1x70x1xf32>
    %97 = vector.shape_cast %96 : vector<1x70x1xf32> to vector<70x1xf32>
    %98 = vector.extract_strided_slice %4 {offsets = [1, 3], sizes = [1, 11], strides = [1, 1]} : vector<4x16xf32> to vector<1x11xf32>
    %99 = vector.broadcast %97 : vector<70x1xf32> to vector<70x11xf32>
    %100 = vector.broadcast %98 : vector<1x11xf32> to vector<70x11xf32>
    %101 = arith.mulf %99, %100 : vector<70x11xf32>
    %102 = arith.addf %95, %101 : vector<70x11xf32>
    %c3_43 = arith.constant 3 : index
    %c0_44 = arith.constant 0 : index
    %c2_45 = arith.constant 2 : index
    %103 = vector.load %arg2[%c3_43, %c0_44, %c2_45] : memref<6x70x4xf32, #tpu.memory_space<vmem>>, vector<1x70x1xf32>
    %104 = vector.shape_cast %103 : vector<1x70x1xf32> to vector<70x1xf32>
    %105 = vector.extract_strided_slice %4 {offsets = [2, 3], sizes = [1, 11], strides = [1, 1]} : vector<4x16xf32> to vector<1x11xf32>
    %106 = vector.broadcast %104 : vector<70x1xf32> to vector<70x11xf32>
    %107 = vector.broadcast %105 : vector<1x11xf32> to vector<70x11xf32>
    %108 = arith.mulf %106, %107 : vector<70x11xf32>
    %109 = arith.addf %102, %108 : vector<70x11xf32>
    %c3_46 = arith.constant 3 : index
    %c0_47 = arith.constant 0 : index
    %c3_48 = arith.constant 3 : index
    %110 = vector.load %arg2[%c3_46, %c0_47, %c3_48] : memref<6x70x4xf32, #tpu.memory_space<vmem>>, vector<1x70x1xf32>
    %111 = vector.shape_cast %110 : vector<1x70x1xf32> to vector<70x1xf32>
    %112 = vector.extract_strided_slice %4 {offsets = [3, 3], sizes = [1, 11], strides = [1, 1]} : vector<4x16xf32> to vector<1x11xf32>
    %113 = vector.broadcast %111 : vector<70x1xf32> to vector<70x11xf32>
    %114 = vector.broadcast %112 : vector<1x11xf32> to vector<70x11xf32>
    %115 = arith.mulf %113, %114 : vector<70x11xf32>
    %116 = arith.addf %109, %115 : vector<70x11xf32>
    %c4 = arith.constant 4 : index
    %c0_49 = arith.constant 0 : index
    %c0_50 = arith.constant 0 : index
    %117 = vector.load %arg2[%c4, %c0_49, %c0_50] : memref<6x70x4xf32, #tpu.memory_space<vmem>>, vector<1x70x1xf32>
    %118 = vector.shape_cast %117 : vector<1x70x1xf32> to vector<70x1xf32>
    %119 = vector.extract_strided_slice %4 {offsets = [0, 4], sizes = [1, 11], strides = [1, 1]} : vector<4x16xf32> to vector<1x11xf32>
    %120 = vector.broadcast %118 : vector<70x1xf32> to vector<70x11xf32>
    %121 = vector.broadcast %119 : vector<1x11xf32> to vector<70x11xf32>
    %122 = arith.mulf %120, %121 : vector<70x11xf32>
    %123 = arith.addf %116, %122 : vector<70x11xf32>
    %c4_51 = arith.constant 4 : index
    %c0_52 = arith.constant 0 : index
    %c1_53 = arith.constant 1 : index
    %124 = vector.load %arg2[%c4_51, %c0_52, %c1_53] : memref<6x70x4xf32, #tpu.memory_space<vmem>>, vector<1x70x1xf32>
    %125 = vector.shape_cast %124 : vector<1x70x1xf32> to vector<70x1xf32>
    %126 = vector.extract_strided_slice %4 {offsets = [1, 4], sizes = [1, 11], strides = [1, 1]} : vector<4x16xf32> to vector<1x11xf32>
    %127 = vector.broadcast %125 : vector<70x1xf32> to vector<70x11xf32>
    %128 = vector.broadcast %126 : vector<1x11xf32> to vector<70x11xf32>
    %129 = arith.mulf %127, %128 : vector<70x11xf32>
    %130 = arith.addf %123, %129 : vector<70x11xf32>
    %c4_54 = arith.constant 4 : index
    %c0_55 = arith.constant 0 : index
    %c2_56 = arith.constant 2 : index
    %131 = vector.load %arg2[%c4_54, %c0_55, %c2_56] : memref<6x70x4xf32, #tpu.memory_space<vmem>>, vector<1x70x1xf32>
    %132 = vector.shape_cast %131 : vector<1x70x1xf32> to vector<70x1xf32>
    %133 = vector.extract_strided_slice %4 {offsets = [2, 4], sizes = [1, 11], strides = [1, 1]} : vector<4x16xf32> to vector<1x11xf32>
    %134 = vector.broadcast %132 : vector<70x1xf32> to vector<70x11xf32>
    %135 = vector.broadcast %133 : vector<1x11xf32> to vector<70x11xf32>
    %136 = arith.mulf %134, %135 : vector<70x11xf32>
    %137 = arith.addf %130, %136 : vector<70x11xf32>
    %c4_57 = arith.constant 4 : index
    %c0_58 = arith.constant 0 : index
    %c3_59 = arith.constant 3 : index
    %138 = vector.load %arg2[%c4_57, %c0_58, %c3_59] : memref<6x70x4xf32, #tpu.memory_space<vmem>>, vector<1x70x1xf32>
    %139 = vector.shape_cast %138 : vector<1x70x1xf32> to vector<70x1xf32>
    %140 = vector.extract_strided_slice %4 {offsets = [3, 4], sizes = [1, 11], strides = [1, 1]} : vector<4x16xf32> to vector<1x11xf32>
    %141 = vector.broadcast %139 : vector<70x1xf32> to vector<70x11xf32>
    %142 = vector.broadcast %140 : vector<1x11xf32> to vector<70x11xf32>
    %143 = arith.mulf %141, %142 : vector<70x11xf32>
    %144 = arith.addf %137, %143 : vector<70x11xf32>
    %c5 = arith.constant 5 : index
    %c0_60 = arith.constant 0 : index
    %c0_61 = arith.constant 0 : index
    %145 = vector.load %arg2[%c5, %c0_60, %c0_61] : memref<6x70x4xf32, #tpu.memory_space<vmem>>, vector<1x70x1xf32>
    %146 = vector.shape_cast %145 : vector<1x70x1xf32> to vector<70x1xf32>
    %147 = vector.extract_strided_slice %4 {offsets = [0, 5], sizes = [1, 11], strides = [1, 1]} : vector<4x16xf32> to vector<1x11xf32>
    %148 = vector.broadcast %146 : vector<70x1xf32> to vector<70x11xf32>
    %149 = vector.broadcast %147 : vector<1x11xf32> to vector<70x11xf32>
    %150 = arith.mulf %148, %149 : vector<70x11xf32>
    %151 = arith.addf %144, %150 : vector<70x11xf32>
    %c5_62 = arith.constant 5 : index
    %c0_63 = arith.constant 0 : index
    %c1_64 = arith.constant 1 : index
    %152 = vector.load %arg2[%c5_62, %c0_63, %c1_64] : memref<6x70x4xf32, #tpu.memory_space<vmem>>, vector<1x70x1xf32>
    %153 = vector.shape_cast %152 : vector<1x70x1xf32> to vector<70x1xf32>
    %154 = vector.extract_strided_slice %4 {offsets = [1, 5], sizes = [1, 11], strides = [1, 1]} : vector<4x16xf32> to vector<1x11xf32>
    %155 = vector.broadcast %153 : vector<70x1xf32> to vector<70x11xf32>
    %156 = vector.broadcast %154 : vector<1x11xf32> to vector<70x11xf32>
    %157 = arith.mulf %155, %156 : vector<70x11xf32>
    %158 = arith.addf %151, %157 : vector<70x11xf32>
    %c5_65 = arith.constant 5 : index
    %c0_66 = arith.constant 0 : index
    %c2_67 = arith.constant 2 : index
    %159 = vector.load %arg2[%c5_65, %c0_66, %c2_67] : memref<6x70x4xf32, #tpu.memory_space<vmem>>, vector<1x70x1xf32>
    %160 = vector.shape_cast %159 : vector<1x70x1xf32> to vector<70x1xf32>
    %161 = vector.extract_strided_slice %4 {offsets = [2, 5], sizes = [1, 11], strides = [1, 1]} : vector<4x16xf32> to vector<1x11xf32>
    %162 = vector.broadcast %160 : vector<70x1xf32> to vector<70x11xf32>
    %163 = vector.broadcast %161 : vector<1x11xf32> to vector<70x11xf32>
    %164 = arith.mulf %162, %163 : vector<70x11xf32>
    %165 = arith.addf %158, %164 : vector<70x11xf32>
    %c5_68 = arith.constant 5 : index
    %c0_69 = arith.constant 0 : index
    %c3_70 = arith.constant 3 : index
    %166 = vector.load %arg2[%c5_68, %c0_69, %c3_70] : memref<6x70x4xf32, #tpu.memory_space<vmem>>, vector<1x70x1xf32>
    %167 = vector.shape_cast %166 : vector<1x70x1xf32> to vector<70x1xf32>
    %168 = vector.extract_strided_slice %4 {offsets = [3, 5], sizes = [1, 11], strides = [1, 1]} : vector<4x16xf32> to vector<1x11xf32>
    %169 = vector.broadcast %167 : vector<70x1xf32> to vector<70x11xf32>
    %170 = vector.broadcast %168 : vector<1x11xf32> to vector<70x11xf32>
    %171 = arith.mulf %169, %170 : vector<70x11xf32>
    %172 = arith.addf %165, %171 : vector<70x11xf32>
    %173 = vector.extract_strided_slice %172 {offsets = [0, 0], sizes = [35, 1], strides = [1, 1]} : vector<70x11xf32> to vector<35x1xf32>
    %c0_71 = arith.constant 0 : index
    %c0_72 = arith.constant 0 : index
    %c0_73 = arith.constant 0 : index
    %174 = vector.load %arg4[%c0_71, %c0_72, %c0_73] : memref<1x35x4xf32, #tpu.memory_space<vmem>>, vector<1x35x1xf32>
    %175 = vector.shape_cast %174 : vector<1x35x1xf32> to vector<35x1xf32>
    %176 = vector.shape_cast %173 : vector<35x1xf32> to vector<1x35x1xf32>
    tpu.vector_store %arg4[%c0_71, %c0_72, %c0_73], %176 {strides = array<i32>} : memref<1x35x4xf32, #tpu.memory_space<vmem>>, vector<1x35x1xf32>,
    %177 = vector.extract_strided_slice %172 {offsets = [35, 4], sizes = [35, 1], strides = [1, 1]} : vector<70x11xf32> to vector<35x1xf32>
    %c0_74 = arith.constant 0 : index
    %c0_75 = arith.constant 0 : index
    %c1_76 = arith.constant 1 : index
    %178 = vector.load %arg4[%c0_74, %c0_75, %c1_76] : memref<1x35x4xf32, #tpu.memory_space<vmem>>, vector<1x35x1xf32>
    %179 = vector.shape_cast %178 : vector<1x35x1xf32> to vector<35x1xf32>
    %180 = vector.shape_cast %177 : vector<35x1xf32> to vector<1x35x1xf32>
    tpu.vector_store %arg4[%c0_74, %c0_75, %c1_76], %180 {strides = array<i32>} : memref<1x35x4xf32, #tpu.memory_space<vmem>>, vector<1x35x1xf32>,
    %181 = vector.extract_strided_slice %172 {offsets = [35, 7], sizes = [35, 1], strides = [1, 1]} : vector<70x11xf32> to vector<35x1xf32>
    %c0_77 = arith.constant 0 : index
    %c0_78 = arith.constant 0 : index
    %c2_79 = arith.constant 2 : index
    %182 = vector.load %arg4[%c0_77, %c0_78, %c2_79] : memref<1x35x4xf32, #tpu.memory_space<vmem>>, vector<1x35x1xf32>
    %183 = vector.shape_cast %182 : vector<1x35x1xf32> to vector<35x1xf32>
    %184 = vector.shape_cast %181 : vector<35x1xf32> to vector<1x35x1xf32>
    tpu.vector_store %arg4[%c0_77, %c0_78, %c2_79], %184 {strides = array<i32>} : memref<1x35x4xf32, #tpu.memory_space<vmem>>, vector<1x35x1xf32>,
    %185 = vector.extract_strided_slice %172 {offsets = [35, 10], sizes = [35, 1], strides = [1, 1]} : vector<70x11xf32> to vector<35x1xf32>
    %c0_80 = arith.constant 0 : index
    %c0_81 = arith.constant 0 : index
    %c3_82 = arith.constant 3 : index
    %186 = vector.load %arg4[%c0_80, %c0_81, %c3_82] : memref<1x35x4xf32, #tpu.memory_space<vmem>>, vector<1x35x1xf32>
    %187 = vector.shape_cast %186 : vector<1x35x1xf32> to vector<35x1xf32>
    %188 = vector.shape_cast %185 : vector<35x1xf32> to vector<1x35x1xf32>
    tpu.vector_store %arg4[%c0_80, %c0_81, %c3_82], %188 {strides = array<i32>} : memref<1x35x4xf32, #tpu.memory_space<vmem>>, vector<1x35x1xf32>,
    return
  }
  func.func @transform_0(%arg0: i32) -> (i32, i32, i32) {
    %c0_i32 = arith.constant 0 : i32
    %c0_i32_0 = arith.constant 0 : i32
    %c0_i32_1 = arith.constant 0 : i32
    return %arg0, %c0_i32, %c0_i32_0 : i32, i32, i32
  }
  func.func @transform_1(%arg0: i32) -> (i32, i32, i32) {
    %c0_i32 = arith.constant 0 : i32
    %c0_i32_0 = arith.constant 0 : i32
    %c0_i32_1 = arith.constant 0 : i32
    %c0_i32_2 = arith.constant 0 : i32
    return %c0_i32, %c0_i32_0, %c0_i32_1 : i32, i32, i32
  }
  func.func @transform_2(%arg0: i32) -> (i32, i32) {
    %c0_i32 = arith.constant 0 : i32
    %c0_i32_0 = arith.constant 0 : i32
    %c0_i32_1 = arith.constant 0 : i32
    return %c0_i32, %c0_i32_0 : i32, i32
  }
  func.func @transform_3(%arg0: i32) -> (i32, i32, i32) {
    %c0_i32 = arith.constant 0 : i32
    %c0_i32_0 = arith.constant 0 : i32
    %c0_i32_1 = arith.constant 0 : i32
    return %arg0, %c0_i32, %c0_i32_0 : i32, i32, i32
  }
}

</mosaic_0001>

<llo_original>
// kernel: tpu_custom_call.1
$region0: #{tpu_custom_call.1}
  #allocation0 [shape = 'u32[]', space=smem, size = 0x4, offset = 0x4, fixed_abs, tag = 'smem constant byte address 0x4 - core index']
  #allocation1 [shape = 'u32[144,128]{1,0:T(1,128)}', space=vmem, size = 0x12000, scoped, tag = 'internal scratch']
  %s0 = inlined_call_operand.vmem [shape: f32[2,4,16], index: 0, kind: input, shape index: {}]
  %s1 = inlined_call_operand.vmem [shape: f32[6,70,4], index: 1, kind: input, shape index: {}]
  %s2 = inlined_call_operand.vmem [shape: f32[70,1], index: 2, kind: input, shape index: {}]
  %s3 = inlined_call_operand.vmem [shape: f32[2,35,4], index: 3, kind: output, shape index: {}]
  %s4 = sld [smem:[#allocation0]]
  $region45: #{tpu_custom_call.1} parent=0
    _
  %s6 = ssub.s32 1, %s4
  %s7 = scalar_select 0, %s6, %s4
  loop: start=0, step=1, limit=4
  $region2: #{tpu_custom_call.1} parent=0 // loop_pre_header
    _
  $region3: #{tpu_custom_call.1} parent=0 // loop_header
    %s9 = sphi 0, %s13
    %p10 = scmp.ge.s32.totalorder %s9, 4
    %s19 = sphi 0, %s21
    %s22 = sphi 0, %s19
    %s23 = sphi 0, %s22
    %s39 = sphi 0, %s23
    %s43 = sphi 0, %s43
    %s45 = sphi 0, %s43
    %s46 = sphi 0, %s45
    %s60 = sphi 0, %s46
    %s64 = sphi 0, %s64
    %s66 = sphi 0, %s64
    %s67 = sphi 0, %s66
    %s81 = sphi 0, %s67
    %s87 = sphi 0, %s89
    %s90 = sphi 0, %s87
    %s91 = sphi 0, %s90
    %s107 = sphi 0, %s91
  $region4: #{tpu_custom_call.1} parent=0 // loop_header_branch
    %12 = sbr.rel (%p10) target = $region8
  $region5: #{tpu_custom_call.1} parent=0 // loop_body
    %s14 = ssub.s32 %s9, 1
    %s15 = ssub.s32 %s9, 2
    %s16 = sadd.s32 %s9, 1
    %s17 = ssub.s32 %s9, %s16
    %p18 = scmp.eq.s32.totalorder %s17, 0
    %s20 = sadd.s32 %s19, 1
    %s21 = scalar_select %p18, %s19, %s20
    %p24 = pneg %p18
    %p25 = scmp.eq.s32.totalorder %s9, 1
    %p26 = por %p24, %p25
    %p27 = scmp.ne.s32.totalorder %s19, %s22
    %p28 = scmp.eq.s32.totalorder %s9, 0
    %p29 = por %p27, %p28
    %p30 = scmp.ne.s32.totalorder %s19, %s22
    %p31 = scmp.eq.s32.totalorder %s14, 1
    %p32 = por %p30, %p31
    %p33 = scmp.ne.s32.totalorder %s22, %s23
    %p34 = scmp.eq.s32.totalorder %s14, 0
    %p35 = por %p33, %p34
    %p36 = scmp.ne.s32.totalorder %s22, %s23
    %p37 = scmp.eq.s32.totalorder %s15, 1
    %p38 = por %p36, %p37
    %p40 = scmp.ne.s32.totalorder %s23, %s39
    %p41 = scmp.eq.s32.totalorder %s15, 0
    %p42 = por %p40, %p41
    %s44 = sadd.s32 %s43, 1
    %p47 = scmp.eq.s32.totalorder %s9, 1
    %p48 = scmp.ne.s32.totalorder %s43, %s45
    %p49 = scmp.eq.s32.totalorder %s9, 0
    %p50 = por %p48, %p49
    %p51 = scmp.ne.s32.totalorder %s43, %s45
    %p52 = scmp.eq.s32.totalorder %s14, 1
    %p53 = por %p51, %p52
    %p54 = scmp.ne.s32.totalorder %s45, %s46
    %p55 = scmp.eq.s32.totalorder %s14, 0
    %p56 = por %p54, %p55
    %p57 = scmp.ne.s32.totalorder %s45, %s46
    %p58 = scmp.eq.s32.totalorder %s15, 1
    %p59 = por %p57, %p58
    %p61 = scmp.ne.s32.totalorder %s46, %s60
    %p62 = scmp.eq.s32.totalorder %s15, 0
    %p63 = por %p61, %p62
    %s65 = sadd.s32 %s64, 1
    %p68 = scmp.eq.s32.totalorder %s9, 1
    %p69 = scmp.ne.s32.totalorder %s64, %s66
    %p70 = scmp.eq.s32.totalorder %s9, 0
    %p71 = por %p69, %p70
    %p72 = scmp.ne.s32.totalorder %s64, %s66
    %p73 = scmp.eq.s32.totalorder %s14, 1
    %p74 = por %p72, %p73
    %p75 = scmp.ne.s32.totalorder %s66, %s67
    %p76 = scmp.eq.s32.totalorder %s14, 0
    %p77 = por %p75, %p76
    %p78 = scmp.ne.s32.totalorder %s66, %s67
    %p79 = scmp.eq.s32.totalorder %s15, 1
    %p80 = por %p78, %p79
    %p82 = scmp.ne.s32.totalorder %s67, %s81
    %p83 = scmp.eq.s32.totalorder %s15, 0
    %p84 = por %p82, %p83
    %s85 = ssub.s32 %s9, %s16
    %p86 = scmp.eq.s32.totalorder %s85, 0
    %s88 = sadd.s32 %s87, 1
    %s89 = scalar_select %p86, %s87, %s88
    %p92 = pneg %p86
    %p93 = scmp.eq.s32.totalorder %s9, 1
    %p94 = por %p92, %p93
    %p95 = scmp.ne.s32.totalorder %s87, %s90
    %p96 = scmp.eq.s32.totalorder %s9, 0
    %p97 = por %p95, %p96
    %p98 = scmp.ne.s32.totalorder %s87, %s90
    %p99 = scmp.eq.s32.totalorder %s14, 1
    %p100 = por %p98, %p99
    %p101 = scmp.ne.s32.totalorder %s90, %s91
    %p102 = scmp.eq.s32.totalorder %s14, 0
    %p103 = por %p101, %p102
    %p104 = scmp.ne.s32.totalorder %s90, %s91
    %p105 = scmp.eq.s32.totalorder %s15, 1
    %p106 = por %p104, %p105
    %p108 = scmp.ne.s32.totalorder %s91, %s107
    %p109 = scmp.eq.s32.totalorder %s15, 0
    %p110 = por %p108, %p109
    %p111 = scmp.le.s32.totalorder 1, %s9
    %p112 = scmp.lt.s32.totalorder %s9, 3
    %p113 = pnand %p111, %p112
    %p114 = pneg %p113
    // Predicated region
    $region9: #{tpu_custom_call.1} parent=5 // pred_check
      _
    $region10: #{tpu_custom_call.1} parent=5 // pred_check_branch
      %116 = sbr.rel (%p113) target = $region12
    $region11: #{tpu_custom_call.1} parent=5 // pred_region
      %s117 = ssub.s32 %s9, 1
      // Predicated region
      $region13: #{tpu_custom_call.1} parent=11 // pred_check
        %p118 = pneg %p56
      $region14: #{tpu_custom_call.1} parent=11 // pred_check_branch
        %120 = sbr.rel (%p118) target = $region16
      $region15: #{tpu_custom_call.1} parent=11 // pred_region
        _
      $region16: #{tpu_custom_call.1} parent=11 // pred_fallthru
        _
      // Predicated region
      $region17: #{tpu_custom_call.1} parent=11 // pred_check
        %p121 = pneg %p77
      $region18: #{tpu_custom_call.1} parent=11 // pred_check_branch
        %123 = sbr.rel (%p121) target = $region20
      $region19: #{tpu_custom_call.1} parent=11 // pred_region
        _
      $region20: #{tpu_custom_call.1} parent=11 // pred_fallthru
        _
    $region12: #{tpu_custom_call.1} parent=5 // pred_fallthru
      _
    %p124 = scmp.lt.s32.totalorder %s9, 2
    // Predicated region
    $region21: #{tpu_custom_call.1} parent=5 // pred_check
      %p125 = pneg %p124
    $region22: #{tpu_custom_call.1} parent=5 // pred_check_branch
      %127 = sbr.rel (%p125) target = $region24
    $region23: #{tpu_custom_call.1} parent=5 // pred_region
      // Predicated region
      $region25: #{tpu_custom_call.1} parent=23 // pred_check
        %p128 = pneg %p29
      $region26: #{tpu_custom_call.1} parent=23 // pred_check_branch
        %130 = sbr.rel (%p128) target = $region28
      $region27: #{tpu_custom_call.1} parent=23 // pred_region
        %p131 = scmp.lt.s32.totalorder %s9, 1
        %s132 = scalar_select %p131, %s9, 1
        %s133 = smul.addr %s132, 4
        %s134 = scalar_lea.vmem %s0, %s133
      $region28: #{tpu_custom_call.1} parent=23 // pred_fallthru
        _
    $region24: #{tpu_custom_call.1} parent=5 // pred_fallthru
      _
    %p135 = scmp.le.s32.totalorder 1, %s9
    %p136 = scmp.lt.s32.totalorder %s9, 3
    %p137 = pnand %p135, %p136
    %p138 = pneg %p137
    // Predicated region
    $region29: #{tpu_custom_call.1} parent=5 // pred_check
      _
    $region30: #{tpu_custom_call.1} parent=5 // pred_check_branch
      %140 = sbr.rel (%p137) target = $region32
    $region31: #{tpu_custom_call.1} parent=5 // pred_region
      %s141 = ssub.s32 %s9, 1
      %p142 = scmp.lt.s32.totalorder %s14, 1
      %s143 = scalar_select %p142, %s14, 1
      %s144 = smul.addr %s143, 4
      %s145 = scalar_lea.vmem %s0, %s144
      %p146 = pneg %p35
      %p147 = pneg %p32
      %p148 = pneg %p56
      %p149 = pneg %p53
      %p150 = pneg %p77
      %p151 = pneg %p74
      %p152 = pneg %p103
      %p153 = pneg %p100
      %p154 = scmp.lt.s32.totalorder %s14, 1
      %s155 = scalar_select %p154, %s14, 1
      %s156 = smul.addr %s155, 5
      %s157 = smul.addr %s156, 8
      %s158 = scalar_lea.vmem %s3, %s157
      %p159 = scmp.lt.s32.totalorder %s14, 1
      %s160 = scalar_select %p159, %s14, 1
      %s161 = smul.addr %s160, 4
      %s162 = scalar_lea.vmem %s0, %s161
      %p163 = scmp.lt.s32.totalorder %s14, 1
      %s164 = scalar_select %p163, %s14, 1
      %s165 = smul.addr %s164, 5
      %s166 = smul.addr %s165, 8
      %s167 = scalar_lea.vmem %s3, %s166
      %v168 = vld [vmem:[%s2] sm:$0xff]
      %v169 = vld [vmem:[%s2 + $0x8] sm:$0xff]
      %v170 = vld [vmem:[%s2 + $0x10] sm:$0xff]
      %v171 = vld [vmem:[%s2 + $0x18] sm:$0xff]
      %v172 = vld [vmem:[%s2 + $0x20] sm:$0xff]
      %v173 = vld [vmem:[%s2 + $0x28] sm:$0xff]
      %v174 = vld [vmem:[%s2 + $0x30] sm:$0xff]
      %v175 = vld [vmem:[%s2 + $0x38] sm:$0xff]
      %v176 = vld [vmem:[%s2 + $0x40] sm:$0x3f]
      %178 = vset.pattern.permute.xlu0 0
      %179 = vperm.xlu0 %178, %v168
      %v180 = vpop.permute.xlu0 %179
      %183 = vset.pattern.permute.xlu0 0
      %184 = vperm.xlu0 %183, %v169
      %v185 = vpop.permute.xlu0 %184
      %188 = vset.pattern.permute.xlu0 0
      %189 = vperm.xlu0 %188, %v170
      %v190 = vpop.permute.xlu0 %189
      %193 = vset.pattern.permute.xlu0 0
      %194 = vperm.xlu0 %193, %v171
      %v195 = vpop.permute.xlu0 %194
      %198 = vset.pattern.permute.xlu0 0
      %199 = vperm.xlu0 %198, %v172
      %v200 = vpop.permute.xlu0 %199
      %203 = vset.pattern.permute.xlu0 0
      %204 = vperm.xlu0 %203, %v173
      %v205 = vpop.permute.xlu0 %204
      %208 = vset.pattern.permute.xlu0 0
      %209 = vperm.xlu0 %208, %v174
      %v210 = vpop.permute.xlu0 %209
      %213 = vset.pattern.permute.xlu0 0
      %214 = vperm.xlu0 %213, %v175
      %v215 = vpop.permute.xlu0 %214
      %218 = vset.pattern.permute.xlu0 0
      %219 = vperm.xlu0 %218, %v176
      %v220 = vpop.permute.xlu0 %219
      %v222 = vld [vmem:[%s162] sm:$0xf]
      %v223 = vld [vmem:[%s1] sm:$0xff]
      %v224 = vld [vmem:[%s1 + $0x8] sm:$0xff]
      %v225 = vld [vmem:[%s1 + $0x10] sm:$0xff]
      %v226 = vld [vmem:[%s1 + $0x18] sm:$0xff]
      %v227 = vld [vmem:[%s1 + $0x20] sm:$0xff]
      %v228 = vld [vmem:[%s1 + $0x28] sm:$0xff]
      %v229 = vld [vmem:[%s1 + $0x30] sm:$0xff]
      %v230 = vld [vmem:[%s1 + $0x38] sm:$0xff]
      %v231 = vld [vmem:[%s1 + $0x40] sm:$0x3f]
      %233 = vset.pattern.permute.xlu0 0
      %234 = vperm.xlu0 %233, %v223
      %v235 = vpop.permute.xlu0 %234
      %238 = vset.pattern.permute.xlu0 0
      %239 = vperm.xlu0 %238, %v224
      %v240 = vpop.permute.xlu0 %239
      %243 = vset.pattern.permute.xlu0 0
      %244 = vperm.xlu0 %243, %v225
      %v245 = vpop.permute.xlu0 %244
      %248 = vset.pattern.permute.xlu0 0
      %249 = vperm.xlu0 %248, %v226
      %v250 = vpop.permute.xlu0 %249
      %253 = vset.pattern.permute.xlu0 0
      %254 = vperm.xlu0 %253, %v227
      %v255 = vpop.permute.xlu0 %254
      %258 = vset.pattern.permute.xlu0 0
      %259 = vperm.xlu0 %258, %v228
      %v260 = vpop.permute.xlu0 %259
      %263 = vset.pattern.permute.xlu0 0
      %264 = vperm.xlu0 %263, %v229
      %v265 = vpop.permute.xlu0 %264
      %268 = vset.pattern.permute.xlu0 0
      %269 = vperm.xlu0 %268, %v230
      %v270 = vpop.permute.xlu0 %269
      %273 = vset.pattern.permute.xlu0 0
      %274 = vperm.xlu0 %273, %v231
      %v275 = vpop.permute.xlu0 %274
      %v277 = vlaneseq
      %v278 = vshrl.u32 %v277, 7
      %v279 = vsub.s32 0, %v278
      %v280 = vrot.slane %v222, %v279
      %v281 = vmul.f32 %v235, %v280
      %v282 = vmul.f32 %v240, %v280
      %v283 = vmul.f32 %v245, %v280
      %v284 = vmul.f32 %v250, %v280
      %v285 = vmul.f32 %v255, %v280
      %v286 = vmul.f32 %v260, %v280
      %v287 = vmul.f32 %v265, %v280
      %v288 = vmul.f32 %v270, %v280
      %v289 = vmul.f32 %v275, %v280
      %v290 = vadd.f32 %v180, %v281
      %v291 = vadd.f32 %v185, %v282
      %v292 = vadd.f32 %v190, %v283
      %v293 = vadd.f32 %v195, %v284
      %v294 = vadd.f32 %v200, %v285
      %v295 = vadd.f32 %v205, %v286
      %v296 = vadd.f32 %v210, %v287
      %v297 = vadd.f32 %v215, %v288
      %v298 = vadd.f32 %v220, %v289
      %299 = vset.pattern.permute.xlu0 1
      %300 = vperm.xlu0 %299, %v223
      %v301 = vpop.permute.xlu0 %300
      %303 = vset.pattern.permute.xlu0 1
      %304 = vperm.xlu0 %303, %v224
      %v305 = vpop.permute.xlu0 %304
      %307 = vset.pattern.permute.xlu0 1
      %308 = vperm.xlu0 %307, %v225
      %v309 = vpop.permute.xlu0 %308
      %311 = vset.pattern.permute.xlu0 1
      %312 = vperm.xlu0 %311, %v226
      %v313 = vpop.permute.xlu0 %312
      %315 = vset.pattern.permute.xlu0 1
      %316 = vperm.xlu0 %315, %v227
      %v317 = vpop.permute.xlu0 %316
      %319 = vset.pattern.permute.xlu0 1
      %320 = vperm.xlu0 %319, %v228
      %v321 = vpop.permute.xlu0 %320
      %323 = vset.pattern.permute.xlu0 1
      %324 = vperm.xlu0 %323, %v229
      %v325 = vpop.permute.xlu0 %324
      %327 = vset.pattern.permute.xlu0 1
      %328 = vperm.xlu0 %327, %v230
      %v329 = vpop.permute.xlu0 %328
      %331 = vset.pattern.permute.xlu0 1
      %332 = vperm.xlu0 %331, %v231
      %v333 = vpop.permute.xlu0 %332
      %v335 = vlaneseq
      %v336 = vshrl.u32 %v335, 7
      %v337 = vsub.s32 1, %v336
      %v338 = vrot.slane %v222, %v337
      %v339 = vmul.f32 %v301, %v338
      %v340 = vmul.f32 %v305, %v338
      %v341 = vmul.f32 %v309, %v338
      %v342 = vmul.f32 %v313, %v338
      %v343 = vmul.f32 %v317, %v338
      %v344 = vmul.f32 %v321, %v338
      %v345 = vmul.f32 %v325, %v338
      %v346 = vmul.f32 %v329, %v338
      %v347 = vmul.f32 %v333, %v338
      %v348 = vadd.f32 %v290, %v339
      %v349 = vadd.f32 %v291, %v340
      %v350 = vadd.f32 %v292, %v341
      %v351 = vadd.f32 %v293, %v342
      %v352 = vadd.f32 %v294, %v343
      %v353 = vadd.f32 %v295, %v344
      %v354 = vadd.f32 %v296, %v345
      %v355 = vadd.f32 %v297, %v346
      %v356 = vadd.f32 %v298, %v347
      %357 = vset.pattern.permute.xlu0 2
      %358 = vperm.xlu0 %357, %v223
      %v359 = vpop.permute.xlu0 %358
      %361 = vset.pattern.permute.xlu0 2
      %362 = vperm.xlu0 %361, %v224
      %v363 = vpop.permute.xlu0 %362
      %365 = vset.pattern.permute.xlu0 2
      %366 = vperm.xlu0 %365, %v225
      %v367 = vpop.permute.xlu0 %366
      %369 = vset.pattern.permute.xlu0 2
      %370 = vperm.xlu0 %369, %v226
      %v371 = vpop.permute.xlu0 %370
      %373 = vset.pattern.permute.xlu0 2
      %374 = vperm.xlu0 %373, %v227
      %v375 = vpop.permute.xlu0 %374
      %377 = vset.pattern.permute.xlu0 2
      %378 = vperm.xlu0 %377, %v228
      %v379 = vpop.permute.xlu0 %378
      %381 = vset.pattern.permute.xlu0 2
      %382 = vperm.xlu0 %381, %v229
      %v383 = vpop.permute.xlu0 %382
      %385 = vset.pattern.permute.xlu0 2
      %386 = vperm.xlu0 %385, %v230
      %v387 = vpop.permute.xlu0 %386
      %389 = vset.pattern.permute.xlu0 2
      %390 = vperm.xlu0 %389, %v231
      %v391 = vpop.permute.xlu0 %390
      %v393 = vlaneseq
      %v394 = vshrl.u32 %v393, 7
      %v395 = vsub.s32 2, %v394
      %v396 = vrot.slane %v222, %v395
      %v397 = vmul.f32 %v359, %v396
      %v398 = vmul.f32 %v363, %v396
      %v399 = vmul.f32 %v367, %v396
      %v400 = vmul.f32 %v371, %v396
      %v401 = vmul.f32 %v375, %v396
      %v402 = vmul.f32 %v379, %v396
      %v403 = vmul.f32 %v383, %v396
      %v404 = vmul.f32 %v387, %v396
      %v405 = vmul.f32 %v391, %v396
      %v406 = vadd.f32 %v348, %v397
      %v407 = vadd.f32 %v349, %v398
      %v408 = vadd.f32 %v350, %v399
      %v409 = vadd.f32 %v351, %v400
      %v410 = vadd.f32 %v352, %v401
      %v411 = vadd.f32 %v353, %v402
      %v412 = vadd.f32 %v354, %v403
      %v413 = vadd.f32 %v355, %v404
      %v414 = vadd.f32 %v356, %v405
      %415 = vset.pattern.permute.xlu0 3
      %416 = vperm.xlu0 %415, %v223
      %v417 = vpop.permute.xlu0 %416
      %419 = vset.pattern.permute.xlu0 3
      %420 = vperm.xlu0 %419, %v224
      %v421 = vpop.permute.xlu0 %420
      %423 = vset.pattern.permute.xlu0 3
      %424 = vperm.xlu0 %423, %v225
      %v425 = vpop.permute.xlu0 %424
      %427 = vset.pattern.permute.xlu0 3
      %428 = vperm.xlu0 %427, %v226
      %v429 = vpop.permute.xlu0 %428
      %431 = vset.pattern.permute.xlu0 3
      %432 = vperm.xlu0 %431, %v227
      %v433 = vpop.permute.xlu0 %432
      %435 = vset.pattern.permute.xlu0 3
      %436 = vperm.xlu0 %435, %v228
      %v437 = vpop.permute.xlu0 %436
      %439 = vset.pattern.permute.xlu0 3
      %440 = vperm.xlu0 %439, %v229
      %v441 = vpop.permute.xlu0 %440
      %443 = vset.pattern.permute.xlu0 3
      %444 = vperm.xlu0 %443, %v230
      %v445 = vpop.permute.xlu0 %444
      %447 = vset.pattern.permute.xlu0 3
      %448 = vperm.xlu0 %447, %v231
      %v449 = vpop.permute.xlu0 %448
      %v451 = vlaneseq
      %v452 = vshrl.u32 %v451, 7
      %v453 = vsub.s32 3, %v452
      %v454 = vrot.slane %v222, %v453
      %v455 = vmul.f32 %v417, %v454
      %v456 = vmul.f32 %v421, %v454
      %v457 = vmul.f32 %v425, %v454
      %v458 = vmul.f32 %v429, %v454
      %v459 = vmul.f32 %v433, %v454
      %v460 = vmul.f32 %v437, %v454
      %v461 = vmul.f32 %v441, %v454
      %v462 = vmul.f32 %v445, %v454
      %v463 = vmul.f32 %v449, %v454
      %v464 = vadd.f32 %v406, %v455
      %v465 = vadd.f32 %v407, %v456
      %v466 = vadd.f32 %v408, %v457
      %v467 = vadd.f32 %v409, %v458
      %v468 = vadd.f32 %v410, %v459
      %v469 = vadd.f32 %v411, %v460
      %v470 = vadd.f32 %v412, %v461
      %v471 = vadd.f32 %v413, %v462
      %v472 = vadd.f32 %v414, %v463
      %s473 = scalar_lea.vmem %s1, 72
      %v474 = vld [vmem:[%s473] sm:$0xff]
      %v475 = vld [vmem:[%s473 + $0x8] sm:$0xff]
      %v476 = vld [vmem:[%s473 + $0x10] sm:$0xff]
      %v477 = vld [vmem:[%s473 + $0x18] sm:$0xff]
      %v478 = vld [vmem:[%s473 + $0x20] sm:$0xff]
      %v479 = vld [vmem:[%s473 + $0x28] sm:$0xff]
      %v480 = vld [vmem:[%s473 + $0x30] sm:$0xff]
      %v481 = vld [vmem:[%s473 + $0x38] sm:$0xff]
      %v482 = vld [vmem:[%s473 + $0x40] sm:$0x3f]
      %484 = vset.pattern.permute.xlu0 0
      %485 = vperm.xlu0 %484, %v474
      %v486 = vpop.permute.xlu0 %485
      %489 = vset.pattern.permute.xlu0 0
      %490 = vperm.xlu0 %489, %v475
      %v491 = vpop.permute.xlu0 %490
      %494 = vset.pattern.permute.xlu0 0
      %495 = vperm.xlu0 %494, %v476
      %v496 = vpop.permute.xlu0 %495
      %499 = vset.pattern.permute.xlu0 0
      %500 = vperm.xlu0 %499, %v477
      %v501 = vpop.permute.xlu0 %500
      %504 = vset.pattern.permute.xlu0 0
      %505 = vperm.xlu0 %504, %v478
      %v506 = vpop.permute.xlu0 %505
      %509 = vset.pattern.permute.xlu0 0
      %510 = vperm.xlu0 %509, %v479
      %v511 = vpop.permute.xlu0 %510
      %514 = vset.pattern.permute.xlu0 0
      %515 = vperm.xlu0 %514, %v480
      %v516 = vpop.permute.xlu0 %515
      %519 = vset.pattern.permute.xlu0 0
      %520 = vperm.xlu0 %519, %v481
      %v521 = vpop.permute.xlu0 %520
      %524 = vset.pattern.permute.xlu0 0
      %525 = vperm.xlu0 %524, %v482
      %v526 = vpop.permute.xlu0 %525
      %v528 = vmul.f32 %v486, %v280
      %v529 = vmul.f32 %v491, %v280
      %v530 = vmul.f32 %v496, %v280
      %v531 = vmul.f32 %v501, %v280
      %v532 = vmul.f32 %v506, %v280
      %v533 = vmul.f32 %v511, %v280
      %v534 = vmul.f32 %v516, %v280
      %v535 = vmul.f32 %v521, %v280
      %v536 = vmul.f32 %v526, %v280
      %546 = vrot.lane.b32.xlu0 %v528, 127
      %v547 = vpop.permute.xlu0 %546
      %548 = vrot.lane.b32.xlu0 %v529, 127
      %v549 = vpop.permute.xlu0 %548
      %550 = vrot.lane.b32.xlu0 %v530, 127
      %v551 = vpop.permute.xlu0 %550
      %552 = vrot.lane.b32.xlu0 %v531, 127
      %v553 = vpop.permute.xlu0 %552
      %554 = vrot.lane.b32.xlu0 %v532, 127
      %v555 = vpop.permute.xlu0 %554
      %556 = vrot.lane.b32.xlu0 %v533, 127
      %v557 = vpop.permute.xlu0 %556
      %558 = vrot.lane.b32.xlu0 %v534, 127
      %v559 = vpop.permute.xlu0 %558
      %560 = vrot.lane.b32.xlu0 %v535, 127
      %v561 = vpop.permute.xlu0 %560
      %562 = vrot.lane.b32.xlu0 %v536, 127
      %v563 = vpop.permute.xlu0 %562
      %v573 = vadd.f32 %v464, %v547
      %v574 = vadd.f32 %v465, %v549
      %v575 = vadd.f32 %v466, %v551
      %v576 = vadd.f32 %v467, %v553
      %v577 = vadd.f32 %v468, %v555
      %v578 = vadd.f32 %v469, %v557
      %v579 = vadd.f32 %v470, %v559
      %v580 = vadd.f32 %v471, %v561
      %v581 = vadd.f32 %v472, %v563
      %582 = vset.pattern.permute.xlu0 1
      %583 = vperm.xlu0 %582, %v474
      %v584 = vpop.permute.xlu0 %583
      %586 = vset.pattern.permute.xlu0 1
      %587 = vperm.xlu0 %586, %v475
      %v588 = vpop.permute.xlu0 %587
      %590 = vset.pattern.permute.xlu0 1
      %591 = vperm.xlu0 %590, %v476
      %v592 = vpop.permute.xlu0 %591
      %594 = vset.pattern.permute.xlu0 1
      %595 = vperm.xlu0 %594, %v477
      %v596 = vpop.permute.xlu0 %595
      %598 = vset.pattern.permute.xlu0 1
      %599 = vperm.xlu0 %598, %v478
      %v600 = vpop.permute.xlu0 %599
      %602 = vset.pattern.permute.xlu0 1
      %603 = vperm.xlu0 %602, %v479
      %v604 = vpop.permute.xlu0 %603
      %606 = vset.pattern.permute.xlu0 1
      %607 = vperm.xlu0 %606, %v480
      %v608 = vpop.permute.xlu0 %607
      %610 = vset.pattern.permute.xlu0 1
      %611 = vperm.xlu0 %610, %v481
      %v612 = vpop.permute.xlu0 %611
      %614 = vset.pattern.permute.xlu0 1
      %615 = vperm.xlu0 %614, %v482
      %v616 = vpop.permute.xlu0 %615
      %v618 = vmul.f32 %v584, %v338
      %v619 = vmul.f32 %v588, %v338
      %v620 = vmul.f32 %v592, %v338
      %v621 = vmul.f32 %v596, %v338
      %v622 = vmul.f32 %v600, %v338
      %v623 = vmul.f32 %v604, %v338
      %v624 = vmul.f32 %v608, %v338
      %v625 = vmul.f32 %v612, %v338
      %v626 = vmul.f32 %v616, %v338
      %636 = vrot.lane.b32.xlu0 %v618, 127
      %v637 = vpop.permute.xlu0 %636
      %638 = vrot.lane.b32.xlu0 %v619, 127
      %v639 = vpop.permute.xlu0 %638
      %640 = vrot.lane.b32.xlu0 %v620, 127
      %v641 = vpop.permute.xlu0 %640
      %642 = vrot.lane.b32.xlu0 %v621, 127
      %v643 = vpop.permute.xlu0 %642
      %644 = vrot.lane.b32.xlu0 %v622, 127
      %v645 = vpop.permute.xlu0 %644
      %646 = vrot.lane.b32.xlu0 %v623, 127
      %v647 = vpop.permute.xlu0 %646
      %648 = vrot.lane.b32.xlu0 %v624, 127
      %v649 = vpop.permute.xlu0 %648
      %650 = vrot.lane.b32.xlu0 %v625, 127
      %v651 = vpop.permute.xlu0 %650
      %652 = vrot.lane.b32.xlu0 %v626, 127
      %v653 = vpop.permute.xlu0 %652
      %v663 = vadd.f32 %v573, %v637
      %v664 = vadd.f32 %v574, %v639
      %v665 = vadd.f32 %v575, %v641
      %v666 = vadd.f32 %v576, %v643
      %v667 = vadd.f32 %v577, %v645
      %v668 = vadd.f32 %v578, %v647
      %v669 = vadd.f32 %v579, %v649
      %v670 = vadd.f32 %v580, %v651
      %v671 = vadd.f32 %v581, %v653
      %672 = vset.pattern.permute.xlu0 2
      %673 = vperm.xlu0 %672, %v474
      %v674 = vpop.permute.xlu0 %673
      %676 = vset.pattern.permute.xlu0 2
      %677 = vperm.xlu0 %676, %v475
      %v678 = vpop.permute.xlu0 %677
      %680 = vset.pattern.permute.xlu0 2
      %681 = vperm.xlu0 %680, %v476
      %v682 = vpop.permute.xlu0 %681
      %684 = vset.pattern.permute.xlu0 2
      %685 = vperm.xlu0 %684, %v477
      %v686 = vpop.permute.xlu0 %685
      %688 = vset.pattern.permute.xlu0 2
      %689 = vperm.xlu0 %688, %v478
      %v690 = vpop.permute.xlu0 %689
      %692 = vset.pattern.permute.xlu0 2
      %693 = vperm.xlu0 %692, %v479
      %v694 = vpop.permute.xlu0 %693
      %696 = vset.pattern.permute.xlu0 2
      %697 = vperm.xlu0 %696, %v480
      %v698 = vpop.permute.xlu0 %697
      %700 = vset.pattern.permute.xlu0 2
      %701 = vperm.xlu0 %700, %v481
      %v702 = vpop.permute.xlu0 %701
      %704 = vset.pattern.permute.xlu0 2
      %705 = vperm.xlu0 %704, %v482
      %v706 = vpop.permute.xlu0 %705
      %v708 = vmul.f32 %v674, %v396
      %v709 = vmul.f32 %v678, %v396
      %v710 = vmul.f32 %v682, %v396
      %v711 = vmul.f32 %v686, %v396
      %v712 = vmul.f32 %v690, %v396
      %v713 = vmul.f32 %v694, %v396
      %v714 = vmul.f32 %v698, %v396
      %v715 = vmul.f32 %v702, %v396
      %v716 = vmul.f32 %v706, %v396
      %726 = vrot.lane.b32.xlu0 %v708, 127
      %v727 = vpop.permute.xlu0 %726
      %728 = vrot.lane.b32.xlu0 %v709, 127
      %v729 = vpop.permute.xlu0 %728
      %730 = vrot.lane.b32.xlu0 %v710, 127
      %v731 = vpop.permute.xlu0 %730
      %732 = vrot.lane.b32.xlu0 %v711, 127
      %v733 = vpop.permute.xlu0 %732
      %734 = vrot.lane.b32.xlu0 %v712, 127
      %v735 = vpop.permute.xlu0 %734
      %736 = vrot.lane.b32.xlu0 %v713, 127
      %v737 = vpop.permute.xlu0 %736
      %738 = vrot.lane.b32.xlu0 %v714, 127
      %v739 = vpop.permute.xlu0 %738
      %740 = vrot.lane.b32.xlu0 %v715, 127
      %v741 = vpop.permute.xlu0 %740
      %742 = vrot.lane.b32.xlu0 %v716, 127
      %v743 = vpop.permute.xlu0 %742
      %v753 = vadd.f32 %v663, %v727
      %v754 = vadd.f32 %v664, %v729
      %v755 = vadd.f32 %v665, %v731
      %v756 = vadd.f32 %v666, %v733
      %v757 = vadd.f32 %v667, %v735
      %v758 = vadd.f32 %v668, %v737
      %v759 = vadd.f32 %v669, %v739
      %v760 = vadd.f32 %v670, %v741
      %v761 = vadd.f32 %v671, %v743
      %762 = vset.pattern.permute.xlu0 3
      %763 = vperm.xlu0 %762, %v474
      %v764 = vpop.permute.xlu0 %763
      %766 = vset.pattern.permute.xlu0 3
      %767 = vperm.xlu0 %766, %v475
      %v768 = vpop.permute.xlu0 %767
      %770 = vset.pattern.permute.xlu0 3
      %771 = vperm.xlu0 %770, %v476
      %v772 = vpop.permute.xlu0 %771
      %774 = vset.pattern.permute.xlu0 3
      %775 = vperm.xlu0 %774, %v477
      %v776 = vpop.permute.xlu0 %775
      %778 = vset.pattern.permute.xlu0 3
      %779 = vperm.xlu0 %778, %v478
      %v780 = vpop.permute.xlu0 %779
      %782 = vset.pattern.permute.xlu0 3
      %783 = vperm.xlu0 %782, %v479
      %v784 = vpop.permute.xlu0 %783
      %786 = vset.pattern.permute.xlu0 3
      %787 = vperm.xlu0 %786, %v480
      %v788 = vpop.permute.xlu0 %787
      %790 = vset.pattern.permute.xlu0 3
      %791 = vperm.xlu0 %790, %v481
      %v792 = vpop.permute.xlu0 %791
      %794 = vset.pattern.permute.xlu0 3
      %795 = vperm.xlu0 %794, %v482
      %v796 = vpop.permute.xlu0 %795
      %v798 = vmul.f32 %v764, %v454
      %v799 = vmul.f32 %v768, %v454
      %v800 = vmul.f32 %v772, %v454
      %v801 = vmul.f32 %v776, %v454
      %v802 = vmul.f32 %v780, %v454
      %v803 = vmul.f32 %v784, %v454
      %v804 = vmul.f32 %v788, %v454
      %v805 = vmul.f32 %v792, %v454
      %v806 = vmul.f32 %v796, %v454
      %816 = vrot.lane.b32.xlu0 %v798, 127
      %v817 = vpop.permute.xlu0 %816
      %818 = vrot.lane.b32.xlu0 %v799, 127
      %v819 = vpop.permute.xlu0 %818
      %820 = vrot.lane.b32.xlu0 %v800, 127
      %v821 = vpop.permute.xlu0 %820
      %822 = vrot.lane.b32.xlu0 %v801, 127
      %v823 = vpop.permute.xlu0 %822
      %824 = vrot.lane.b32.xlu0 %v802, 127
      %v825 = vpop.permute.xlu0 %824
      %826 = vrot.lane.b32.xlu0 %v803, 127
      %v827 = vpop.permute.xlu0 %826
      %828 = vrot.lane.b32.xlu0 %v804, 127
      %v829 = vpop.permute.xlu0 %828
      %830 = vrot.lane.b32.xlu0 %v805, 127
      %v831 = vpop.permute.xlu0 %830
      %832 = vrot.lane.b32.xlu0 %v806, 127
      %v833 = vpop.permute.xlu0 %832
      %v843 = vadd.f32 %v753, %v817
      %v844 = vadd.f32 %v754, %v819
      %v845 = vadd.f32 %v755, %v821
      %v846 = vadd.f32 %v756, %v823
      %v847 = vadd.f32 %v757, %v825
      %v848 = vadd.f32 %v758, %v827
      %v849 = vadd.f32 %v759, %v829
      %v850 = vadd.f32 %v760, %v831
      %v851 = vadd.f32 %v761, %v833
      %s852 = scalar_lea.vmem %s1, 144
      %v853 = vld [vmem:[%s852] sm:$0xff]
      %v854 = vld [vmem:[%s852 + $0x8] sm:$0xff]
      %v855 = vld [vmem:[%s852 + $0x10] sm:$0xff]
      %v856 = vld [vmem:[%s852 + $0x18] sm:$0xff]
      %v857 = vld [vmem:[%s852 + $0x20] sm:$0xff]
      %v858 = vld [vmem:[%s852 + $0x28] sm:$0xff]
      %v859 = vld [vmem:[%s852 + $0x30] sm:$0xff]
      %v860 = vld [vmem:[%s852 + $0x38] sm:$0xff]
      %v861 = vld [vmem:[%s852 + $0x40] sm:$0x3f]
      %863 = vset.pattern.permute.xlu0 0
      %864 = vperm.xlu0 %863, %v853
      %v865 = vpop.permute.xlu0 %864
      %868 = vset.pattern.permute.xlu0 0
      %869 = vperm.xlu0 %868, %v854
      %v870 = vpop.permute.xlu0 %869
      %873 = vset.pattern.permute.xlu0 0
      %874 = vperm.xlu0 %873, %v855
      %v875 = vpop.permute.xlu0 %874
      %878 = vset.pattern.permute.xlu0 0
      %879 = vperm.xlu0 %878, %v856
      %v880 = vpop.permute.xlu0 %879
      %883 = vset.pattern.permute.xlu0 0
      %884 = vperm.xlu0 %883, %v857
      %v885 = vpop.permute.xlu0 %884
      %888 = vset.pattern.permute.xlu0 0
      %889 = vperm.xlu0 %888, %v858
      %v890 = vpop.permute.xlu0 %889
      %893 = vset.pattern.permute.xlu0 0
      %894 = vperm.xlu0 %893, %v859
      %v895 = vpop.permute.xlu0 %894
      %898 = vset.pattern.permute.xlu0 0
      %899 = vperm.xlu0 %898, %v860
      %v900 = vpop.permute.xlu0 %899
      %903 = vset.pattern.permute.xlu0 0
      %904 = vperm.xlu0 %903, %v861
      %v905 = vpop.permute.xlu0 %904
      %v907 = vmul.f32 %v865, %v280
      %v908 = vmul.f32 %v870, %v280
      %v909 = vmul.f32 %v875, %v280
      %v910 = vmul.f32 %v880, %v280
      %v911 = vmul.f32 %v885, %v280
      %v912 = vmul.f32 %v890, %v280
      %v913 = vmul.f32 %v895, %v280
      %v914 = vmul.f32 %v900, %v280
      %v915 = vmul.f32 %v905, %v280
      %925 = vrot.lane.b32.xlu0 %v907, 126
      %v926 = vpop.permute.xlu0 %925
      %927 = vrot.lane.b32.xlu0 %v908, 126
      %v928 = vpop.permute.xlu0 %927
      %929 = vrot.lane.b32.xlu0 %v909, 126
      %v930 = vpop.permute.xlu0 %929
      %931 = vrot.lane.b32.xlu0 %v910, 126
      %v932 = vpop.permute.xlu0 %931
      %933 = vrot.lane.b32.xlu0 %v911, 126
      %v934 = vpop.permute.xlu0 %933
      %935 = vrot.lane.b32.xlu0 %v912, 126
      %v936 = vpop.permute.xlu0 %935
      %937 = vrot.lane.b32.xlu0 %v913, 126
      %v938 = vpop.permute.xlu0 %937
      %939 = vrot.lane.b32.xlu0 %v914, 126
      %v940 = vpop.permute.xlu0 %939
      %941 = vrot.lane.b32.xlu0 %v915, 126
      %v942 = vpop.permute.xlu0 %941
      %v952 = vadd.f32 %v843, %v926
      %v953 = vadd.f32 %v844, %v928
      %v954 = vadd.f32 %v845, %v930
      %v955 = vadd.f32 %v846, %v932
      %v956 = vadd.f32 %v847, %v934
      %v957 = vadd.f32 %v848, %v936
      %v958 = vadd.f32 %v849, %v938
      %v959 = vadd.f32 %v850, %v940
      %v960 = vadd.f32 %v851, %v942
      %961 = vset.pattern.permute.xlu0 1
      %962 = vperm.xlu0 %961, %v853
      %v963 = vpop.permute.xlu0 %962
      %965 = vset.pattern.permute.xlu0 1
      %966 = vperm.xlu0 %965, %v854
      %v967 = vpop.permute.xlu0 %966
      %969 = vset.pattern.permute.xlu0 1
      %970 = vperm.xlu0 %969, %v855
      %v971 = vpop.permute.xlu0 %970
      %973 = vset.pattern.permute.xlu0 1
      %974 = vperm.xlu0 %973, %v856
      %v975 = vpop.permute.xlu0 %974
      %977 = vset.pattern.permute.xlu0 1
      %978 = vperm.xlu0 %977, %v857
      %v979 = vpop.permute.xlu0 %978
      %981 = vset.pattern.permute.xlu0 1
      %982 = vperm.xlu0 %981, %v858
      %v983 = vpop.permute.xlu0 %982
      %985 = vset.pattern.permute.xlu0 1
      %986 = vperm.xlu0 %985, %v859
      %v987 = vpop.permute.xlu0 %986
      %989 = vset.pattern.permute.xlu0 1
      %990 = vperm.xlu0 %989, %v860
      %v991 = vpop.permute.xlu0 %990
      %993 = vset.pattern.permute.xlu0 1
      %994 = vperm.xlu0 %993, %v861
      %v995 = vpop.permute.xlu0 %994
      %v997 = vmul.f32 %v963, %v338
      %v998 = vmul.f32 %v967, %v338
      %v999 = vmul.f32 %v971, %v338
      %v1000 = vmul.f32 %v975, %v338
      %v1001 = vmul.f32 %v979, %v338
      %v1002 = vmul.f32 %v983, %v338
      %v1003 = vmul.f32 %v987, %v338
      %v1004 = vmul.f32 %v991, %v338
      %v1005 = vmul.f32 %v995, %v338
      %1015 = vrot.lane.b32.xlu0 %v997, 126
      %v1016 = vpop.permute.xlu0 %1015
      %1017 = vrot.lane.b32.xlu0 %v998, 126
      %v1018 = vpop.permute.xlu0 %1017
      %1019 = vrot.lane.b32.xlu0 %v999, 126
      %v1020 = vpop.permute.xlu0 %1019
      %1021 = vrot.lane.b32.xlu0 %v1000, 126
      %v1022 = vpop.permute.xlu0 %1021
      %1023 = vrot.lane.b32.xlu0 %v1001, 126
      %v1024 = vpop.permute.xlu0 %1023
      %1025 = vrot.lane.b32.xlu0 %v1002, 126
      %v1026 = vpop.permute.xlu0 %1025
      %1027 = vrot.lane.b32.xlu0 %v1003, 126
      %v1028 = vpop.permute.xlu0 %1027
      %1029 = vrot.lane.b32.xlu0 %v1004, 126
      %v1030 = vpop.permute.xlu0 %1029
      %1031 = vrot.lane.b32.xlu0 %v1005, 126
      %v1032 = vpop.permute.xlu0 %1031
      %v1042 = vadd.f32 %v952, %v1016
      %v1043 = vadd.f32 %v953, %v1018
      %v1044 = vadd.f32 %v954, %v1020
      %v1045 = vadd.f32 %v955, %v1022
      %v1046 = vadd.f32 %v956, %v1024
      %v1047 = vadd.f32 %v957, %v1026
      %v1048 = vadd.f32 %v958, %v1028
      %v1049 = vadd.f32 %v959, %v1030
      %v1050 = vadd.f32 %v960, %v1032
      %1051 = vset.pattern.permute.xlu0 2
      %1052 = vperm.xlu0 %1051, %v853
      %v1053 = vpop.permute.xlu0 %1052
      %1055 = vset.pattern.permute.xlu0 2
      %1056 = vperm.xlu0 %1055, %v854
      %v1057 = vpop.permute.xlu0 %1056
      %1059 = vset.pattern.permute.xlu0 2
      %1060 = vperm.xlu0 %1059, %v855
      %v1061 = vpop.permute.xlu0 %1060
      %1063 = vset.pattern.permute.xlu0 2
      %1064 = vperm.xlu0 %1063, %v856
      %v1065 = vpop.permute.xlu0 %1064
      %1067 = vset.pattern.permute.xlu0 2
      %1068 = vperm.xlu0 %1067, %v857
      %v1069 = vpop.permute.xlu0 %1068
      %1071 = vset.pattern.permute.xlu0 2
      %1072 = vperm.xlu0 %1071, %v858
      %v1073 = vpop.permute.xlu0 %1072
      %1075 = vset.pattern.permute.xlu0 2
      %1076 = vperm.xlu0 %1075, %v859
      %v1077 = vpop.permute.xlu0 %1076
      %1079 = vset.pattern.permute.xlu0 2
      %1080 = vperm.xlu0 %1079, %v860
      %v1081 = vpop.permute.xlu0 %1080
      %1083 = vset.pattern.permute.xlu0 2
      %1084 = vperm.xlu0 %1083, %v861
      %v1085 = vpop.permute.xlu0 %1084
      %v1087 = vmul.f32 %v1053, %v396
      %v1088 = vmul.f32 %v1057, %v396
      %v1089 = vmul.f32 %v1061, %v396
      %v1090 = vmul.f32 %v1065, %v396
      %v1091 = vmul.f32 %v1069, %v396
      %v1092 = vmul.f32 %v1073, %v396
      %v1093 = vmul.f32 %v1077, %v396
      %v1094 = vmul.f32 %v1081, %v396
      %v1095 = vmul.f32 %v1085, %v396
      %1105 = vrot.lane.b32.xlu0 %v1087, 126
      %v1106 = vpop.permute.xlu0 %1105
      %1107 = vrot.lane.b32.xlu0 %v1088, 126
      %v1108 = vpop.permute.xlu0 %1107
      %1109 = vrot.lane.b32.xlu0 %v1089, 126
      %v1110 = vpop.permute.xlu0 %1109
      %1111 = vrot.lane.b32.xlu0 %v1090, 126
      %v1112 = vpop.permute.xlu0 %1111
      %1113 = vrot.lane.b32.xlu0 %v1091, 126
      %v1114 = vpop.permute.xlu0 %1113
      %1115 = vrot.lane.b32.xlu0 %v1092, 126
      %v1116 = vpop.permute.xlu0 %1115
      %1117 = vrot.lane.b32.xlu0 %v1093, 126
      %v1118 = vpop.permute.xlu0 %1117
      %1119 = vrot.lane.b32.xlu0 %v1094, 126
      %v1120 = vpop.permute.xlu0 %1119
      %1121 = vrot.lane.b32.xlu0 %v1095, 126
      %v1122 = vpop.permute.xlu0 %1121
      %v1132 = vadd.f32 %v1042, %v1106
      %v1133 = vadd.f32 %v1043, %v1108
      %v1134 = vadd.f32 %v1044, %v1110
      %v1135 = vadd.f32 %v1045, %v1112
      %v1136 = vadd.f32 %v1046, %v1114
      %v1137 = vadd.f32 %v1047, %v1116
      %v1138 = vadd.f32 %v1048, %v1118
      %v1139 = vadd.f32 %v1049, %v1120
      %v1140 = vadd.f32 %v1050, %v1122
      %1141 = vset.pattern.permute.xlu0 3
      %1142 = vperm.xlu0 %1141, %v853
      %v1143 = vpop.permute.xlu0 %1142
      %1145 = vset.pattern.permute.xlu0 3
      %1146 = vperm.xlu0 %1145, %v854
      %v1147 = vpop.permute.xlu0 %1146
      %1149 = vset.pattern.permute.xlu0 3
      %1150 = vperm.xlu0 %1149, %v855
      %v1151 = vpop.permute.xlu0 %1150
      %1153 = vset.pattern.permute.xlu0 3
      %1154 = vperm.xlu0 %1153, %v856
      %v1155 = vpop.permute.xlu0 %1154
      %1157 = vset.pattern.permute.xlu0 3
      %1158 = vperm.xlu0 %1157, %v857
      %v1159 = vpop.permute.xlu0 %1158
      %1161 = vset.pattern.permute.xlu0 3
      %1162 = vperm.xlu0 %1161, %v858
      %v1163 = vpop.permute.xlu0 %1162
      %1165 = vset.pattern.permute.xlu0 3
      %1166 = vperm.xlu0 %1165, %v859
      %v1167 = vpop.permute.xlu0 %1166
      %1169 = vset.pattern.permute.xlu0 3
      %1170 = vperm.xlu0 %1169, %v860
      %v1171 = vpop.permute.xlu0 %1170
      %1173 = vset.pattern.permute.xlu0 3
      %1174 = vperm.xlu0 %1173, %v861
      %v1175 = vpop.permute.xlu0 %1174
      %v1177 = vmul.f32 %v1143, %v454
      %v1178 = vmul.f32 %v1147, %v454
      %v1179 = vmul.f32 %v1151, %v454
      %v1180 = vmul.f32 %v1155, %v454
      %v1181 = vmul.f32 %v1159, %v454
      %v1182 = vmul.f32 %v1163, %v454
      %v1183 = vmul.f32 %v1167, %v454
      %v1184 = vmul.f32 %v1171, %v454
      %v1185 = vmul.f32 %v1175, %v454
      %1195 = vrot.lane.b32.xlu0 %v1177, 126
      %v1196 = vpop.permute.xlu0 %1195
      %1197 = vrot.lane.b32.xlu0 %v1178, 126
      %v1198 = vpop.permute.xlu0 %1197
      %1199 = vrot.lane.b32.xlu0 %v1179, 126
      %v1200 = vpop.permute.xlu0 %1199
      %1201 = vrot.lane.b32.xlu0 %v1180, 126
      %v1202 = vpop.permute.xlu0 %1201
      %1203 = vrot.lane.b32.xlu0 %v1181, 126
      %v1204 = vpop.permute.xlu0 %1203
      %1205 = vrot.lane.b32.xlu0 %v1182, 126
      %v1206 = vpop.permute.xlu0 %1205
      %1207 = vrot.lane.b32.xlu0 %v1183, 126
      %v1208 = vpop.permute.xlu0 %1207
      %1209 = vrot.lane.b32.xlu0 %v1184, 126
      %v1210 = vpop.permute.xlu0 %1209
      %1211 = vrot.lane.b32.xlu0 %v1185, 126
      %v1212 = vpop.permute.xlu0 %1211
      %v1222 = vadd.f32 %v1132, %v1196
      %v1223 = vadd.f32 %v1133, %v1198
      %v1224 = vadd.f32 %v1134, %v1200
      %v1225 = vadd.f32 %v1135, %v1202
      %v1226 = vadd.f32 %v1136, %v1204
      %v1227 = vadd.f32 %v1137, %v1206
      %v1228 = vadd.f32 %v1138, %v1208
      %v1229 = vadd.f32 %v1139, %v1210
      %v1230 = vadd.f32 %v1140, %v1212
      %s1231 = scalar_lea.vmem %s1, 216
      %v1232 = vld [vmem:[%s1231] sm:$0xff]
      %v1233 = vld [vmem:[%s1231 + $0x8] sm:$0xff]
      %v1234 = vld [vmem:[%s1231 + $0x10] sm:$0xff]
      %v1235 = vld [vmem:[%s1231 + $0x18] sm:$0xff]
      %v1236 = vld [vmem:[%s1231 + $0x20] sm:$0xff]
      %v1237 = vld [vmem:[%s1231 + $0x28] sm:$0xff]
      %v1238 = vld [vmem:[%s1231 + $0x30] sm:$0xff]
      %v1239 = vld [vmem:[%s1231 + $0x38] sm:$0xff]
      %v1240 = vld [vmem:[%s1231 + $0x40] sm:$0x3f]
      %1242 = vset.pattern.permute.xlu0 0
      %1243 = vperm.xlu0 %1242, %v1232
      %v1244 = vpop.permute.xlu0 %1243
      %1247 = vset.pattern.permute.xlu0 0
      %1248 = vperm.xlu0 %1247, %v1233
      %v1249 = vpop.permute.xlu0 %1248
      %1252 = vset.pattern.permute.xlu0 0
      %1253 = vperm.xlu0 %1252, %v1234
      %v1254 = vpop.permute.xlu0 %1253
      %1257 = vset.pattern.permute.xlu0 0
      %1258 = vperm.xlu0 %1257, %v1235
      %v1259 = vpop.permute.xlu0 %1258
      %1262 = vset.pattern.permute.xlu0 0
      %1263 = vperm.xlu0 %1262, %v1236
      %v1264 = vpop.permute.xlu0 %1263
      %1267 = vset.pattern.permute.xlu0 0
      %1268 = vperm.xlu0 %1267, %v1237
      %v1269 = vpop.permute.xlu0 %1268
      %1272 = vset.pattern.permute.xlu0 0
      %1273 = vperm.xlu0 %1272, %v1238
      %v1274 = vpop.permute.xlu0 %1273
      %1277 = vset.pattern.permute.xlu0 0
      %1278 = vperm.xlu0 %1277, %v1239
      %v1279 = vpop.permute.xlu0 %1278
      %1282 = vset.pattern.permute.xlu0 0
      %1283 = vperm.xlu0 %1282, %v1240
      %v1284 = vpop.permute.xlu0 %1283
      %v1286 = vmul.f32 %v1244, %v280
      %v1287 = vmul.f32 %v1249, %v280
      %v1288 = vmul.f32 %v1254, %v280
      %v1289 = vmul.f32 %v1259, %v280
      %v1290 = vmul.f32 %v1264, %v280
      %v1291 = vmul.f32 %v1269, %v280
      %v1292 = vmul.f32 %v1274, %v280
      %v1293 = vmul.f32 %v1279, %v280
      %v1294 = vmul.f32 %v1284, %v280
      %1304 = vrot.lane.b32.xlu0 %v1286, 125
      %v1305 = vpop.permute.xlu0 %1304
      %1306 = vrot.lane.b32.xlu0 %v1287, 125
      %v1307 = vpop.permute.xlu0 %1306
      %1308 = vrot.lane.b32.xlu0 %v1288, 125
      %v1309 = vpop.permute.xlu0 %1308
      %1310 = vrot.lane.b32.xlu0 %v1289, 125
      %v1311 = vpop.permute.xlu0 %1310
      %1312 = vrot.lane.b32.xlu0 %v1290, 125
      %v1313 = vpop.permute.xlu0 %1312
      %1314 = vrot.lane.b32.xlu0 %v1291, 125
      %v1315 = vpop.permute.xlu0 %1314
      %1316 = vrot.lane.b32.xlu0 %v1292, 125
      %v1317 = vpop.permute.xlu0 %1316
      %1318 = vrot.lane.b32.xlu0 %v1293, 125
      %v1319 = vpop.permute.xlu0 %1318
      %1320 = vrot.lane.b32.xlu0 %v1294, 125
      %v1321 = vpop.permute.xlu0 %1320
      %v1331 = vadd.f32 %v1222, %v1305
      %v1332 = vadd.f32 %v1223, %v1307
      %v1333 = vadd.f32 %v1224, %v1309
      %v1334 = vadd.f32 %v1225, %v1311
      %v1335 = vadd.f32 %v1226, %v1313
      %v1336 = vadd.f32 %v1227, %v1315
      %v1337 = vadd.f32 %v1228, %v1317
      %v1338 = vadd.f32 %v1229, %v1319
      %v1339 = vadd.f32 %v1230, %v1321
      %1340 = vset.pattern.permute.xlu0 1
      %1341 = vperm.xlu0 %1340, %v1232
      %v1342 = vpop.permute.xlu0 %1341
      %1344 = vset.pattern.permute.xlu0 1
      %1345 = vperm.xlu0 %1344, %v1233
      %v1346 = vpop.permute.xlu0 %1345
      %1348 = vset.pattern.permute.xlu0 1
      %1349 = vperm.xlu0 %1348, %v1234
      %v1350 = vpop.permute.xlu0 %1349
      %1352 = vset.pattern.permute.xlu0 1
      %1353 = vperm.xlu0 %1352, %v1235
      %v1354 = vpop.permute.xlu0 %1353
      %1356 = vset.pattern.permute.xlu0 1
      %1357 = vperm.xlu0 %1356, %v1236
      %v1358 = vpop.permute.xlu0 %1357
      %1360 = vset.pattern.permute.xlu0 1
      %1361 = vperm.xlu0 %1360, %v1237
      %v1362 = vpop.permute.xlu0 %1361
      %1364 = vset.pattern.permute.xlu0 1
      %1365 = vperm.xlu0 %1364, %v1238
      %v1366 = vpop.permute.xlu0 %1365
      %1368 = vset.pattern.permute.xlu0 1
      %1369 = vperm.xlu0 %1368, %v1239
      %v1370 = vpop.permute.xlu0 %1369
      %1372 = vset.pattern.permute.xlu0 1
      %1373 = vperm.xlu0 %1372, %v1240
      %v1374 = vpop.permute.xlu0 %1373
      %v1376 = vmul.f32 %v1342, %v338
      %v1377 = vmul.f32 %v1346, %v338
      %v1378 = vmul.f32 %v1350, %v338
      %v1379 = vmul.f32 %v1354, %v338
      %v1380 = vmul.f32 %v1358, %v338
      %v1381 = vmul.f32 %v1362, %v338
      %v1382 = vmul.f32 %v1366, %v338
      %v1383 = vmul.f32 %v1370, %v338
      %v1384 = vmul.f32 %v1374, %v338
      %1394 = vrot.lane.b32.xlu0 %v1376, 125
      %v1395 = vpop.permute.xlu0 %1394
      %1396 = vrot.lane.b32.xlu0 %v1377, 125
      %v1397 = vpop.permute.xlu0 %1396
      %1398 = vrot.lane.b32.xlu0 %v1378, 125
      %v1399 = vpop.permute.xlu0 %1398
      %1400 = vrot.lane.b32.xlu0 %v1379, 125
      %v1401 = vpop.permute.xlu0 %1400
      %1402 = vrot.lane.b32.xlu0 %v1380, 125
      %v1403 = vpop.permute.xlu0 %1402
      %1404 = vrot.lane.b32.xlu0 %v1381, 125
      %v1405 = vpop.permute.xlu0 %1404
      %1406 = vrot.lane.b32.xlu0 %v1382, 125
      %v1407 = vpop.permute.xlu0 %1406
      %1408 = vrot.lane.b32.xlu0 %v1383, 125
      %v1409 = vpop.permute.xlu0 %1408
      %1410 = vrot.lane.b32.xlu0 %v1384, 125
      %v1411 = vpop.permute.xlu0 %1410
      %v1421 = vadd.f32 %v1331, %v1395
      %v1422 = vadd.f32 %v1332, %v1397
      %v1423 = vadd.f32 %v1333, %v1399
      %v1424 = vadd.f32 %v1334, %v1401
      %v1425 = vadd.f32 %v1335, %v1403
      %v1426 = vadd.f32 %v1336, %v1405
      %v1427 = vadd.f32 %v1337, %v1407
      %v1428 = vadd.f32 %v1338, %v1409
      %v1429 = vadd.f32 %v1339, %v1411
      %1430 = vset.pattern.permute.xlu0 2
      %1431 = vperm.xlu0 %1430, %v1232
      %v1432 = vpop.permute.xlu0 %1431
      %1434 = vset.pattern.permute.xlu0 2
      %1435 = vperm.xlu0 %1434, %v1233
      %v1436 = vpop.permute.xlu0 %1435
      %1438 = vset.pattern.permute.xlu0 2
      %1439 = vperm.xlu0 %1438, %v1234
      %v1440 = vpop.permute.xlu0 %1439
      %1442 = vset.pattern.permute.xlu0 2
      %1443 = vperm.xlu0 %1442, %v1235
      %v1444 = vpop.permute.xlu0 %1443
      %1446 = vset.pattern.permute.xlu0 2
      %1447 = vperm.xlu0 %1446, %v1236
      %v1448 = vpop.permute.xlu0 %1447
      %1450 = vset.pattern.permute.xlu0 2
      %1451 = vperm.xlu0 %1450, %v1237
      %v1452 = vpop.permute.xlu0 %1451
      %1454 = vset.pattern.permute.xlu0 2
      %1455 = vperm.xlu0 %1454, %v1238
      %v1456 = vpop.permute.xlu0 %1455
      %1458 = vset.pattern.permute.xlu0 2
      %1459 = vperm.xlu0 %1458, %v1239
      %v1460 = vpop.permute.xlu0 %1459
      %1462 = vset.pattern.permute.xlu0 2
      %1463 = vperm.xlu0 %1462, %v1240
      %v1464 = vpop.permute.xlu0 %1463
      %v1466 = vmul.f32 %v1432, %v396
      %v1467 = vmul.f32 %v1436, %v396
      %v1468 = vmul.f32 %v1440, %v396
      %v1469 = vmul.f32 %v1444, %v396
      %v1470 = vmul.f32 %v1448, %v396
      %v1471 = vmul.f32 %v1452, %v396
      %v1472 = vmul.f32 %v1456, %v396
      %v1473 = vmul.f32 %v1460, %v396
      %v1474 = vmul.f32 %v1464, %v396
      %1484 = vrot.lane.b32.xlu0 %v1466, 125
      %v1485 = vpop.permute.xlu0 %1484
      %1486 = vrot.lane.b32.xlu0 %v1467, 125
      %v1487 = vpop.permute.xlu0 %1486
      %1488 = vrot.lane.b32.xlu0 %v1468, 125
      %v1489 = vpop.permute.xlu0 %1488
      %1490 = vrot.lane.b32.xlu0 %v1469, 125
      %v1491 = vpop.permute.xlu0 %1490
      %1492 = vrot.lane.b32.xlu0 %v1470, 125
      %v1493 = vpop.permute.xlu0 %1492
      %1494 = vrot.lane.b32.xlu0 %v1471, 125
      %v1495 = vpop.permute.xlu0 %1494
      %1496 = vrot.lane.b32.xlu0 %v1472, 125
      %v1497 = vpop.permute.xlu0 %1496
      %1498 = vrot.lane.b32.xlu0 %v1473, 125
      %v1499 = vpop.permute.xlu0 %1498
      %1500 = vrot.lane.b32.xlu0 %v1474, 125
      %v1501 = vpop.permute.xlu0 %1500
      %v1511 = vadd.f32 %v1421, %v1485
      %v1512 = vadd.f32 %v1422, %v1487
      %v1513 = vadd.f32 %v1423, %v1489
      %v1514 = vadd.f32 %v1424, %v1491
      %v1515 = vadd.f32 %v1425, %v1493
      %v1516 = vadd.f32 %v1426, %v1495
      %v1517 = vadd.f32 %v1427, %v1497
      %v1518 = vadd.f32 %v1428, %v1499
      %v1519 = vadd.f32 %v1429, %v1501
      %1520 = vset.pattern.permute.xlu0 3
      %1521 = vperm.xlu0 %1520, %v1232
      %v1522 = vpop.permute.xlu0 %1521
      %1524 = vset.pattern.permute.xlu0 3
      %1525 = vperm.xlu0 %1524, %v1233
      %v1526 = vpop.permute.xlu0 %1525
      %1528 = vset.pattern.permute.xlu0 3
      %1529 = vperm.xlu0 %1528, %v1234
      %v1530 = vpop.permute.xlu0 %1529
      %1532 = vset.pattern.permute.xlu0 3
      %1533 = vperm.xlu0 %1532, %v1235
      %v1534 = vpop.permute.xlu0 %1533
      %1536 = vset.pattern.permute.xlu0 3
      %1537 = vperm.xlu0 %1536, %v1236
      %v1538 = vpop.permute.xlu0 %1537
      %1540 = vset.pattern.permute.xlu0 3
      %1541 = vperm.xlu0 %1540, %v1237
      %v1542 = vpop.permute.xlu0 %1541
      %1544 = vset.pattern.permute.xlu0 3
      %1545 = vperm.xlu0 %1544, %v1238
      %v1546 = vpop.permute.xlu0 %1545
      %1548 = vset.pattern.permute.xlu0 3
      %1549 = vperm.xlu0 %1548, %v1239
      %v1550 = vpop.permute.xlu0 %1549
      %1552 = vset.pattern.permute.xlu0 3
      %1553 = vperm.xlu0 %1552, %v1240
      %v1554 = vpop.permute.xlu0 %1553
      %v1556 = vmul.f32 %v1522, %v454
      %v1557 = vmul.f32 %v1526, %v454
      %v1558 = vmul.f32 %v1530, %v454
      %v1559 = vmul.f32 %v1534, %v454
      %v1560 = vmul.f32 %v1538, %v454
      %v1561 = vmul.f32 %v1542, %v454
      %v1562 = vmul.f32 %v1546, %v454
      %v1563 = vmul.f32 %v1550, %v454
      %v1564 = vmul.f32 %v1554, %v454
      %1574 = vrot.lane.b32.xlu0 %v1556, 125
      %v1575 = vpop.permute.xlu0 %1574
      %1576 = vrot.lane.b32.xlu0 %v1557, 125
      %v1577 = vpop.permute.xlu0 %1576
      %1578 = vrot.lane.b32.xlu0 %v1558, 125
      %v1579 = vpop.permute.xlu0 %1578
      %1580 = vrot.lane.b32.xlu0 %v1559, 125
      %v1581 = vpop.permute.xlu0 %1580
      %1582 = vrot.lane.b32.xlu0 %v1560, 125
      %v1583 = vpop.permute.xlu0 %1582
      %1584 = vrot.lane.b32.xlu0 %v1561, 125
      %v1585 = vpop.permute.xlu0 %1584
      %1586 = vrot.lane.b32.xlu0 %v1562, 125
      %v1587 = vpop.permute.xlu0 %1586
      %1588 = vrot.lane.b32.xlu0 %v1563, 125
      %v1589 = vpop.permute.xlu0 %1588
      %1590 = vrot.lane.b32.xlu0 %v1564, 125
      %v1591 = vpop.permute.xlu0 %1590
      %v1601 = vadd.f32 %v1511, %v1575
      %v1602 = vadd.f32 %v1512, %v1577
      %v1603 = vadd.f32 %v1513, %v1579
      %v1604 = vadd.f32 %v1514, %v1581
      %v1605 = vadd.f32 %v1515, %v1583
      %v1606 = vadd.f32 %v1516, %v1585
      %v1607 = vadd.f32 %v1517, %v1587
      %v1608 = vadd.f32 %v1518, %v1589
      %v1609 = vadd.f32 %v1519, %v1591
      %s1610 = scalar_lea.vmem %s1, 288
      %v1611 = vld [vmem:[%s1610] sm:$0xff]
      %v1612 = vld [vmem:[%s1610 + $0x8] sm:$0xff]
      %v1613 = vld [vmem:[%s1610 + $0x10] sm:$0xff]
      %v1614 = vld [vmem:[%s1610 + $0x18] sm:$0xff]
      %v1615 = vld [vmem:[%s1610 + $0x20] sm:$0xff]
      %v1616 = vld [vmem:[%s1610 + $0x28] sm:$0xff]
      %v1617 = vld [vmem:[%s1610 + $0x30] sm:$0xff]
      %v1618 = vld [vmem:[%s1610 + $0x38] sm:$0xff]
      %v1619 = vld [vmem:[%s1610 + $0x40] sm:$0x3f]
      %1621 = vset.pattern.permute.xlu0 0
      %1622 = vperm.xlu0 %1621, %v1611
      %v1623 = vpop.permute.xlu0 %1622
      %1626 = vset.pattern.permute.xlu0 0
      %1627 = vperm.xlu0 %1626, %v1612
      %v1628 = vpop.permute.xlu0 %1627
      %1631 = vset.pattern.permute.xlu0 0
      %1632 = vperm.xlu0 %1631, %v1613
      %v1633 = vpop.permute.xlu0 %1632
      %1636 = vset.pattern.permute.xlu0 0
      %1637 = vperm.xlu0 %1636, %v1614
      %v1638 = vpop.permute.xlu0 %1637
      %1641 = vset.pattern.permute.xlu0 0
      %1642 = vperm.xlu0 %1641, %v1615
      %v1643 = vpop.permute.xlu0 %1642
      %1646 = vset.pattern.permute.xlu0 0
      %1647 = vperm.xlu0 %1646, %v1616
      %v1648 = vpop.permute.xlu0 %1647
      %1651 = vset.pattern.permute.xlu0 0
      %1652 = vperm.xlu0 %1651, %v1617
      %v1653 = vpop.permute.xlu0 %1652
      %1656 = vset.pattern.permute.xlu0 0
      %1657 = vperm.xlu0 %1656, %v1618
      %v1658 = vpop.permute.xlu0 %1657
      %1661 = vset.pattern.permute.xlu0 0
      %1662 = vperm.xlu0 %1661, %v1619
      %v1663 = vpop.permute.xlu0 %1662
      %v1665 = vmul.f32 %v1623, %v280
      %v1666 = vmul.f32 %v1628, %v280
      %v1667 = vmul.f32 %v1633, %v280
      %v1668 = vmul.f32 %v1638, %v280
      %v1669 = vmul.f32 %v1643, %v280
      %v1670 = vmul.f32 %v1648, %v280
      %v1671 = vmul.f32 %v1653, %v280
      %v1672 = vmul.f32 %v1658, %v280
      %v1673 = vmul.f32 %v1663, %v280
      %1683 = vrot.lane.b32.xlu0 %v1665, 124
      %v1684 = vpop.permute.xlu0 %1683
      %1685 = vrot.lane.b32.xlu0 %v1666, 124
      %v1686 = vpop.permute.xlu0 %1685
      %1687 = vrot.lane.b32.xlu0 %v1667, 124
      %v1688 = vpop.permute.xlu0 %1687
      %1689 = vrot.lane.b32.xlu0 %v1668, 124
      %v1690 = vpop.permute.xlu0 %1689
      %1691 = vrot.lane.b32.xlu0 %v1669, 124
      %v1692 = vpop.permute.xlu0 %1691
      %1693 = vrot.lane.b32.xlu0 %v1670, 124
      %v1694 = vpop.permute.xlu0 %1693
      %1695 = vrot.lane.b32.xlu0 %v1671, 124
      %v1696 = vpop.permute.xlu0 %1695
      %1697 = vrot.lane.b32.xlu0 %v1672, 124
      %v1698 = vpop.permute.xlu0 %1697
      %1699 = vrot.lane.b32.xlu0 %v1673, 124
      %v1700 = vpop.permute.xlu0 %1699
      %v1710 = vadd.f32 %v1601, %v1684
      %v1711 = vadd.f32 %v1602, %v1686
      %v1712 = vadd.f32 %v1603, %v1688
      %v1713 = vadd.f32 %v1604, %v1690
      %v1714 = vadd.f32 %v1605, %v1692
      %v1715 = vadd.f32 %v1606, %v1694
      %v1716 = vadd.f32 %v1607, %v1696
      %v1717 = vadd.f32 %v1608, %v1698
      %v1718 = vadd.f32 %v1609, %v1700
      %1719 = vset.pattern.permute.xlu0 1
      %1720 = vperm.xlu0 %1719, %v1611
      %v1721 = vpop.permute.xlu0 %1720
      %1723 = vset.pattern.permute.xlu0 1
      %1724 = vperm.xlu0 %1723, %v1612
      %v1725 = vpop.permute.xlu0 %1724
      %1727 = vset.pattern.permute.xlu0 1
      %1728 = vperm.xlu0 %1727, %v1613
      %v1729 = vpop.permute.xlu0 %1728
      %1731 = vset.pattern.permute.xlu0 1
      %1732 = vperm.xlu0 %1731, %v1614
      %v1733 = vpop.permute.xlu0 %1732
      %1735 = vset.pattern.permute.xlu0 1
      %1736 = vperm.xlu0 %1735, %v1615
      %v1737 = vpop.permute.xlu0 %1736
      %1739 = vset.pattern.permute.xlu0 1
      %1740 = vperm.xlu0 %1739, %v1616
      %v1741 = vpop.permute.xlu0 %1740
      %1743 = vset.pattern.permute.xlu0 1
      %1744 = vperm.xlu0 %1743, %v1617
      %v1745 = vpop.permute.xlu0 %1744
      %1747 = vset.pattern.permute.xlu0 1
      %1748 = vperm.xlu0 %1747, %v1618
      %v1749 = vpop.permute.xlu0 %1748
      %1751 = vset.pattern.permute.xlu0 1
      %1752 = vperm.xlu0 %1751, %v1619
      %v1753 = vpop.permute.xlu0 %1752
      %v1755 = vmul.f32 %v1721, %v338
      %v1756 = vmul.f32 %v1725, %v338
      %v1757 = vmul.f32 %v1729, %v338
      %v1758 = vmul.f32 %v1733, %v338
      %v1759 = vmul.f32 %v1737, %v338
      %v1760 = vmul.f32 %v1741, %v338
      %v1761 = vmul.f32 %v1745, %v338
      %v1762 = vmul.f32 %v1749, %v338
      %v1763 = vmul.f32 %v1753, %v338
      %1773 = vrot.lane.b32.xlu0 %v1755, 124
      %v1774 = vpop.permute.xlu0 %1773
      %1775 = vrot.lane.b32.xlu0 %v1756, 124
      %v1776 = vpop.permute.xlu0 %1775
      %1777 = vrot.lane.b32.xlu0 %v1757, 124
      %v1778 = vpop.permute.xlu0 %1777
      %1779 = vrot.lane.b32.xlu0 %v1758, 124
      %v1780 = vpop.permute.xlu0 %1779
      %1781 = vrot.lane.b32.xlu0 %v1759, 124
      %v1782 = vpop.permute.xlu0 %1781
      %1783 = vrot.lane.b32.xlu0 %v1760, 124
      %v1784 = vpop.permute.xlu0 %1783
      %1785 = vrot.lane.b32.xlu0 %v1761, 124
      %v1786 = vpop.permute.xlu0 %1785
      %1787 = vrot.lane.b32.xlu0 %v1762, 124
      %v1788 = vpop.permute.xlu0 %1787
      %1789 = vrot.lane.b32.xlu0 %v1763, 124
      %v1790 = vpop.permute.xlu0 %1789
      %v1800 = vadd.f32 %v1710, %v1774
      %v1801 = vadd.f32 %v1711, %v1776
      %v1802 = vadd.f32 %v1712, %v1778
      %v1803 = vadd.f32 %v1713, %v1780
      %v1804 = vadd.f32 %v1714, %v1782
      %v1805 = vadd.f32 %v1715, %v1784
      %v1806 = vadd.f32 %v1716, %v1786
      %v1807 = vadd.f32 %v1717, %v1788
      %v1808 = vadd.f32 %v1718, %v1790
      %1809 = vset.pattern.permute.xlu0 2
      %1810 = vperm.xlu0 %1809, %v1611
      %v1811 = vpop.permute.xlu0 %1810
      %1813 = vset.pattern.permute.xlu0 2
      %1814 = vperm.xlu0 %1813, %v1612
      %v1815 = vpop.permute.xlu0 %1814
      %1817 = vset.pattern.permute.xlu0 2
      %1818 = vperm.xlu0 %1817, %v1613
      %v1819 = vpop.permute.xlu0 %1818
      %1821 = vset.pattern.permute.xlu0 2
      %1822 = vperm.xlu0 %1821, %v1614
      %v1823 = vpop.permute.xlu0 %1822
      %1825 = vset.pattern.permute.xlu0 2
      %1826 = vperm.xlu0 %1825, %v1615
      %v1827 = vpop.permute.xlu0 %1826
      %1829 = vset.pattern.permute.xlu0 2
      %1830 = vperm.xlu0 %1829, %v1616
      %v1831 = vpop.permute.xlu0 %1830
      %1833 = vset.pattern.permute.xlu0 2
      %1834 = vperm.xlu0 %1833, %v1617
      %v1835 = vpop.permute.xlu0 %1834
      %1837 = vset.pattern.permute.xlu0 2
      %1838 = vperm.xlu0 %1837, %v1618
      %v1839 = vpop.permute.xlu0 %1838
      %1841 = vset.pattern.permute.xlu0 2
      %1842 = vperm.xlu0 %1841, %v1619
      %v1843 = vpop.permute.xlu0 %1842
      %v1845 = vmul.f32 %v1811, %v396
      %v1846 = vmul.f32 %v1815, %v396
      %v1847 = vmul.f32 %v1819, %v396
      %v1848 = vmul.f32 %v1823, %v396
      %v1849 = vmul.f32 %v1827, %v396
      %v1850 = vmul.f32 %v1831, %v396
      %v1851 = vmul.f32 %v1835, %v396
      %v1852 = vmul.f32 %v1839, %v396
      %v1853 = vmul.f32 %v1843, %v396
      %1863 = vrot.lane.b32.xlu0 %v1845, 124
      %v1864 = vpop.permute.xlu0 %1863
      %1865 = vrot.lane.b32.xlu0 %v1846, 124
      %v1866 = vpop.permute.xlu0 %1865
      %1867 = vrot.lane.b32.xlu0 %v1847, 124
      %v1868 = vpop.permute.xlu0 %1867
      %1869 = vrot.lane.b32.xlu0 %v1848, 124
      %v1870 = vpop.permute.xlu0 %1869
      %1871 = vrot.lane.b32.xlu0 %v1849, 124
      %v1872 = vpop.permute.xlu0 %1871
      %1873 = vrot.lane.b32.xlu0 %v1850, 124
      %v1874 = vpop.permute.xlu0 %1873
      %1875 = vrot.lane.b32.xlu0 %v1851, 124
      %v1876 = vpop.permute.xlu0 %1875
      %1877 = vrot.lane.b32.xlu0 %v1852, 124
      %v1878 = vpop.permute.xlu0 %1877
      %1879 = vrot.lane.b32.xlu0 %v1853, 124
      %v1880 = vpop.permute.xlu0 %1879
      %v1890 = vadd.f32 %v1800, %v1864
      %v1891 = vadd.f32 %v1801, %v1866
      %v1892 = vadd.f32 %v1802, %v1868
      %v1893 = vadd.f32 %v1803, %v1870
      %v1894 = vadd.f32 %v1804, %v1872
      %v1895 = vadd.f32 %v1805, %v1874
      %v1896 = vadd.f32 %v1806, %v1876
      %v1897 = vadd.f32 %v1807, %v1878
      %v1898 = vadd.f32 %v1808, %v1880
      %1899 = vset.pattern.permute.xlu0 3
      %1900 = vperm.xlu0 %1899, %v1611
      %v1901 = vpop.permute.xlu0 %1900
      %1903 = vset.pattern.permute.xlu0 3
      %1904 = vperm.xlu0 %1903, %v1612
      %v1905 = vpop.permute.xlu0 %1904
      %1907 = vset.pattern.permute.xlu0 3
      %1908 = vperm.xlu0 %1907, %v1613
      %v1909 = vpop.permute.xlu0 %1908
      %1911 = vset.pattern.permute.xlu0 3
      %1912 = vperm.xlu0 %1911, %v1614
      %v1913 = vpop.permute.xlu0 %1912
      %1915 = vset.pattern.permute.xlu0 3
      %1916 = vperm.xlu0 %1915, %v1615
      %v1917 = vpop.permute.xlu0 %1916
      %1919 = vset.pattern.permute.xlu0 3
      %1920 = vperm.xlu0 %1919, %v1616
      %v1921 = vpop.permute.xlu0 %1920
      %1923 = vset.pattern.permute.xlu0 3
      %1924 = vperm.xlu0 %1923, %v1617
      %v1925 = vpop.permute.xlu0 %1924
      %1927 = vset.pattern.permute.xlu0 3
      %1928 = vperm.xlu0 %1927, %v1618
      %v1929 = vpop.permute.xlu0 %1928
      %1931 = vset.pattern.permute.xlu0 3
      %1932 = vperm.xlu0 %1931, %v1619
      %v1933 = vpop.permute.xlu0 %1932
      %v1935 = vmul.f32 %v1901, %v454
      %v1936 = vmul.f32 %v1905, %v454
      %v1937 = vmul.f32 %v1909, %v454
      %v1938 = vmul.f32 %v1913, %v454
      %v1939 = vmul.f32 %v1917, %v454
      %v1940 = vmul.f32 %v1921, %v454
      %v1941 = vmul.f32 %v1925, %v454
      %v1942 = vmul.f32 %v1929, %v454
      %v1943 = vmul.f32 %v1933, %v454
      %1953 = vrot.lane.b32.xlu0 %v1935, 124
      %v1954 = vpop.permute.xlu0 %1953
      %1955 = vrot.lane.b32.xlu0 %v1936, 124
      %v1956 = vpop.permute.xlu0 %1955
      %1957 = vrot.lane.b32.xlu0 %v1937, 124
      %v1958 = vpop.permute.xlu0 %1957
      %1959 = vrot.lane.b32.xlu0 %v1938, 124
      %v1960 = vpop.permute.xlu0 %1959
      %1961 = vrot.lane.b32.xlu0 %v1939, 124
      %v1962 = vpop.permute.xlu0 %1961
      %1963 = vrot.lane.b32.xlu0 %v1940, 124
      %v1964 = vpop.permute.xlu0 %1963
      %1965 = vrot.lane.b32.xlu0 %v1941, 124
      %v1966 = vpop.permute.xlu0 %1965
      %1967 = vrot.lane.b32.xlu0 %v1942, 124
      %v1968 = vpop.permute.xlu0 %1967
      %1969 = vrot.lane.b32.xlu0 %v1943, 124
      %v1970 = vpop.permute.xlu0 %1969
      %v1980 = vadd.f32 %v1890, %v1954
      %v1981 = vadd.f32 %v1891, %v1956
      %v1982 = vadd.f32 %v1892, %v1958
      %v1983 = vadd.f32 %v1893, %v1960
      %v1984 = vadd.f32 %v1894, %v1962
      %v1985 = vadd.f32 %v1895, %v1964
      %v1986 = vadd.f32 %v1896, %v1966
      %v1987 = vadd.f32 %v1897, %v1968
      %v1988 = vadd.f32 %v1898, %v1970
      %s1989 = scalar_lea.vmem %s1, 360
      %v1990 = vld [vmem:[%s1989] sm:$0xff]
      %v1991 = vld [vmem:[%s1989 + $0x8] sm:$0xff]
      %v1992 = vld [vmem:[%s1989 + $0x10] sm:$0xff]
      %v1993 = vld [vmem:[%s1989 + $0x18] sm:$0xff]
      %v1994 = vld [vmem:[%s1989 + $0x20] sm:$0xff]
      %v1995 = vld [vmem:[%s1989 + $0x28] sm:$0xff]
      %v1996 = vld [vmem:[%s1989 + $0x30] sm:$0xff]
      %v1997 = vld [vmem:[%s1989 + $0x38] sm:$0xff]
      %v1998 = vld [vmem:[%s1989 + $0x40] sm:$0x3f]
      %2000 = vset.pattern.permute.xlu0 0
      %2001 = vperm.xlu0 %2000, %v1990
      %v2002 = vpop.permute.xlu0 %2001
      %2005 = vset.pattern.permute.xlu0 0
      %2006 = vperm.xlu0 %2005, %v1991
      %v2007 = vpop.permute.xlu0 %2006
      %2010 = vset.pattern.permute.xlu0 0
      %2011 = vperm.xlu0 %2010, %v1992
      %v2012 = vpop.permute.xlu0 %2011
      %2015 = vset.pattern.permute.xlu0 0
      %2016 = vperm.xlu0 %2015, %v1993
      %v2017 = vpop.permute.xlu0 %2016
      %2020 = vset.pattern.permute.xlu0 0
      %2021 = vperm.xlu0 %2020, %v1994
      %v2022 = vpop.permute.xlu0 %2021
      %2025 = vset.pattern.permute.xlu0 0
      %2026 = vperm.xlu0 %2025, %v1995
      %v2027 = vpop.permute.xlu0 %2026
      %2030 = vset.pattern.permute.xlu0 0
      %2031 = vperm.xlu0 %2030, %v1996
      %v2032 = vpop.permute.xlu0 %2031
      %2035 = vset.pattern.permute.xlu0 0
      %2036 = vperm.xlu0 %2035, %v1997
      %v2037 = vpop.permute.xlu0 %2036
      %2040 = vset.pattern.permute.xlu0 0
      %2041 = vperm.xlu0 %2040, %v1998
      %v2042 = vpop.permute.xlu0 %2041
      %v2044 = vmul.f32 %v2002, %v280
      %v2045 = vmul.f32 %v2007, %v280
      %v2046 = vmul.f32 %v2012, %v280
      %v2047 = vmul.f32 %v2017, %v280
      %v2048 = vmul.f32 %v2022, %v280
      %v2049 = vmul.f32 %v2027, %v280
      %v2050 = vmul.f32 %v2032, %v280
      %v2051 = vmul.f32 %v2037, %v280
      %v2052 = vmul.f32 %v2042, %v280
      %2062 = vrot.lane.b32.xlu0 %v2044, 123
      %v2063 = vpop.permute.xlu0 %2062
      %2064 = vrot.lane.b32.xlu0 %v2045, 123
      %v2065 = vpop.permute.xlu0 %2064
      %2066 = vrot.lane.b32.xlu0 %v2046, 123
      %v2067 = vpop.permute.xlu0 %2066
      %2068 = vrot.lane.b32.xlu0 %v2047, 123
      %v2069 = vpop.permute.xlu0 %2068
      %2070 = vrot.lane.b32.xlu0 %v2048, 123
      %v2071 = vpop.permute.xlu0 %2070
      %2072 = vrot.lane.b32.xlu0 %v2049, 123
      %v2073 = vpop.permute.xlu0 %2072
      %2074 = vrot.lane.b32.xlu0 %v2050, 123
      %v2075 = vpop.permute.xlu0 %2074
      %2076 = vrot.lane.b32.xlu0 %v2051, 123
      %v2077 = vpop.permute.xlu0 %2076
      %2078 = vrot.lane.b32.xlu0 %v2052, 123
      %v2079 = vpop.permute.xlu0 %2078
      %v2089 = vadd.f32 %v1980, %v2063
      %v2090 = vadd.f32 %v1981, %v2065
      %v2091 = vadd.f32 %v1982, %v2067
      %v2092 = vadd.f32 %v1983, %v2069
      %v2093 = vadd.f32 %v1984, %v2071
      %v2094 = vadd.f32 %v1985, %v2073
      %v2095 = vadd.f32 %v1986, %v2075
      %v2096 = vadd.f32 %v1987, %v2077
      %v2097 = vadd.f32 %v1988, %v2079
      %2098 = vset.pattern.permute.xlu0 1
      %2099 = vperm.xlu0 %2098, %v1990
      %v2100 = vpop.permute.xlu0 %2099
      %2102 = vset.pattern.permute.xlu0 1
      %2103 = vperm.xlu0 %2102, %v1991
      %v2104 = vpop.permute.xlu0 %2103
      %2106 = vset.pattern.permute.xlu0 1
      %2107 = vperm.xlu0 %2106, %v1992
      %v2108 = vpop.permute.xlu0 %2107
      %2110 = vset.pattern.permute.xlu0 1
      %2111 = vperm.xlu0 %2110, %v1993
      %v2112 = vpop.permute.xlu0 %2111
      %2114 = vset.pattern.permute.xlu0 1
      %2115 = vperm.xlu0 %2114, %v1994
      %v2116 = vpop.permute.xlu0 %2115
      %2118 = vset.pattern.permute.xlu0 1
      %2119 = vperm.xlu0 %2118, %v1995
      %v2120 = vpop.permute.xlu0 %2119
      %2122 = vset.pattern.permute.xlu0 1
      %2123 = vperm.xlu0 %2122, %v1996
      %v2124 = vpop.permute.xlu0 %2123
      %2126 = vset.pattern.permute.xlu0 1
      %2127 = vperm.xlu0 %2126, %v1997
      %v2128 = vpop.permute.xlu0 %2127
      %2130 = vset.pattern.permute.xlu0 1
      %2131 = vperm.xlu0 %2130, %v1998
      %v2132 = vpop.permute.xlu0 %2131
      %v2134 = vmul.f32 %v2100, %v338
      %v2135 = vmul.f32 %v2104, %v338
      %v2136 = vmul.f32 %v2108, %v338
      %v2137 = vmul.f32 %v2112, %v338
      %v2138 = vmul.f32 %v2116, %v338
      %v2139 = vmul.f32 %v2120, %v338
      %v2140 = vmul.f32 %v2124, %v338
      %v2141 = vmul.f32 %v2128, %v338
      %v2142 = vmul.f32 %v2132, %v338
      %2152 = vrot.lane.b32.xlu0 %v2134, 123
      %v2153 = vpop.permute.xlu0 %2152
      %2154 = vrot.lane.b32.xlu0 %v2135, 123
      %v2155 = vpop.permute.xlu0 %2154
      %2156 = vrot.lane.b32.xlu0 %v2136, 123
      %v2157 = vpop.permute.xlu0 %2156
      %2158 = vrot.lane.b32.xlu0 %v2137, 123
      %v2159 = vpop.permute.xlu0 %2158
      %2160 = vrot.lane.b32.xlu0 %v2138, 123
      %v2161 = vpop.permute.xlu0 %2160
      %2162 = vrot.lane.b32.xlu0 %v2139, 123
      %v2163 = vpop.permute.xlu0 %2162
      %2164 = vrot.lane.b32.xlu0 %v2140, 123
      %v2165 = vpop.permute.xlu0 %2164
      %2166 = vrot.lane.b32.xlu0 %v2141, 123
      %v2167 = vpop.permute.xlu0 %2166
      %2168 = vrot.lane.b32.xlu0 %v2142, 123
      %v2169 = vpop.permute.xlu0 %2168
      %v2179 = vadd.f32 %v2089, %v2153
      %v2180 = vadd.f32 %v2090, %v2155
      %v2181 = vadd.f32 %v2091, %v2157
      %v2182 = vadd.f32 %v2092, %v2159
      %v2183 = vadd.f32 %v2093, %v2161
      %v2184 = vadd.f32 %v2094, %v2163
      %v2185 = vadd.f32 %v2095, %v2165
      %v2186 = vadd.f32 %v2096, %v2167
      %v2187 = vadd.f32 %v2097, %v2169
      %2188 = vset.pattern.permute.xlu0 2
      %2189 = vperm.xlu0 %2188, %v1990
      %v2190 = vpop.permute.xlu0 %2189
      %2192 = vset.pattern.permute.xlu0 2
      %2193 = vperm.xlu0 %2192, %v1991
      %v2194 = vpop.permute.xlu0 %2193
      %2196 = vset.pattern.permute.xlu0 2
      %2197 = vperm.xlu0 %2196, %v1992
      %v2198 = vpop.permute.xlu0 %2197
      %2200 = vset.pattern.permute.xlu0 2
      %2201 = vperm.xlu0 %2200, %v1993
      %v2202 = vpop.permute.xlu0 %2201
      %2204 = vset.pattern.permute.xlu0 2
      %2205 = vperm.xlu0 %2204, %v1994
      %v2206 = vpop.permute.xlu0 %2205
      %2208 = vset.pattern.permute.xlu0 2
      %2209 = vperm.xlu0 %2208, %v1995
      %v2210 = vpop.permute.xlu0 %2209
      %2212 = vset.pattern.permute.xlu0 2
      %2213 = vperm.xlu0 %2212, %v1996
      %v2214 = vpop.permute.xlu0 %2213
      %2216 = vset.pattern.permute.xlu0 2
      %2217 = vperm.xlu0 %2216, %v1997
      %v2218 = vpop.permute.xlu0 %2217
      %2220 = vset.pattern.permute.xlu0 2
      %2221 = vperm.xlu0 %2220, %v1998
      %v2222 = vpop.permute.xlu0 %2221
      %v2224 = vmul.f32 %v2190, %v396
      %v2225 = vmul.f32 %v2194, %v396
      %v2226 = vmul.f32 %v2198, %v396
      %v2227 = vmul.f32 %v2202, %v396
      %v2228 = vmul.f32 %v2206, %v396
      %v2229 = vmul.f32 %v2210, %v396
      %v2230 = vmul.f32 %v2214, %v396
      %v2231 = vmul.f32 %v2218, %v396
      %v2232 = vmul.f32 %v2222, %v396
      %2242 = vrot.lane.b32.xlu0 %v2224, 123
      %v2243 = vpop.permute.xlu0 %2242
      %2244 = vrot.lane.b32.xlu0 %v2225, 123
      %v2245 = vpop.permute.xlu0 %2244
      %2246 = vrot.lane.b32.xlu0 %v2226, 123
      %v2247 = vpop.permute.xlu0 %2246
      %2248 = vrot.lane.b32.xlu0 %v2227, 123
      %v2249 = vpop.permute.xlu0 %2248
      %2250 = vrot.lane.b32.xlu0 %v2228, 123
      %v2251 = vpop.permute.xlu0 %2250
      %2252 = vrot.lane.b32.xlu0 %v2229, 123
      %v2253 = vpop.permute.xlu0 %2252
      %2254 = vrot.lane.b32.xlu0 %v2230, 123
      %v2255 = vpop.permute.xlu0 %2254
      %2256 = vrot.lane.b32.xlu0 %v2231, 123
      %v2257 = vpop.permute.xlu0 %2256
      %2258 = vrot.lane.b32.xlu0 %v2232, 123
      %v2259 = vpop.permute.xlu0 %2258
      %v2269 = vadd.f32 %v2179, %v2243
      %v2270 = vadd.f32 %v2180, %v2245
      %v2271 = vadd.f32 %v2181, %v2247
      %v2272 = vadd.f32 %v2182, %v2249
      %v2273 = vadd.f32 %v2183, %v2251
      %v2274 = vadd.f32 %v2184, %v2253
      %v2275 = vadd.f32 %v2185, %v2255
      %v2276 = vadd.f32 %v2186, %v2257
      %v2277 = vadd.f32 %v2187, %v2259
      %2278 = vset.pattern.permute.xlu0 3
      %2279 = vperm.xlu0 %2278, %v1990
      %v2280 = vpop.permute.xlu0 %2279
      %2282 = vset.pattern.permute.xlu0 3
      %2283 = vperm.xlu0 %2282, %v1991
      %v2284 = vpop.permute.xlu0 %2283
      %2286 = vset.pattern.permute.xlu0 3
      %2287 = vperm.xlu0 %2286, %v1992
      %v2288 = vpop.permute.xlu0 %2287
      %2290 = vset.pattern.permute.xlu0 3
      %2291 = vperm.xlu0 %2290, %v1993
      %v2292 = vpop.permute.xlu0 %2291
      %2294 = vset.pattern.permute.xlu0 3
      %2295 = vperm.xlu0 %2294, %v1994
      %v2296 = vpop.permute.xlu0 %2295
      %2298 = vset.pattern.permute.xlu0 3
      %2299 = vperm.xlu0 %2298, %v1995
      %v2300 = vpop.permute.xlu0 %2299
      %2302 = vset.pattern.permute.xlu0 3
      %2303 = vperm.xlu0 %2302, %v1996
      %v2304 = vpop.permute.xlu0 %2303
      %2306 = vset.pattern.permute.xlu0 3
      %2307 = vperm.xlu0 %2306, %v1997
      %v2308 = vpop.permute.xlu0 %2307
      %2310 = vset.pattern.permute.xlu0 3
      %2311 = vperm.xlu0 %2310, %v1998
      %v2312 = vpop.permute.xlu0 %2311
      %v2314 = vmul.f32 %v2280, %v454
      %v2315 = vmul.f32 %v2284, %v454
      %v2316 = vmul.f32 %v2288, %v454
      %v2317 = vmul.f32 %v2292, %v454
      %v2318 = vmul.f32 %v2296, %v454
      %v2319 = vmul.f32 %v2300, %v454
      %v2320 = vmul.f32 %v2304, %v454
      %v2321 = vmul.f32 %v2308, %v454
      %v2322 = vmul.f32 %v2312, %v454
      %2332 = vrot.lane.b32.xlu0 %v2314, 123
      %v2333 = vpop.permute.xlu0 %2332
      %2334 = vrot.lane.b32.xlu0 %v2315, 123
      %v2335 = vpop.permute.xlu0 %2334
      %2336 = vrot.lane.b32.xlu0 %v2316, 123
      %v2337 = vpop.permute.xlu0 %2336
      %2338 = vrot.lane.b32.xlu0 %v2317, 123
      %v2339 = vpop.permute.xlu0 %2338
      %2340 = vrot.lane.b32.xlu0 %v2318, 123
      %v2341 = vpop.permute.xlu0 %2340
      %2342 = vrot.lane.b32.xlu0 %v2319, 123
      %v2343 = vpop.permute.xlu0 %2342
      %2344 = vrot.lane.b32.xlu0 %v2320, 123
      %v2345 = vpop.permute.xlu0 %2344
      %2346 = vrot.lane.b32.xlu0 %v2321, 123
      %v2347 = vpop.permute.xlu0 %2346
      %2348 = vrot.lane.b32.xlu0 %v2322, 123
      %v2349 = vpop.permute.xlu0 %2348
      %v2359 = vadd.f32 %v2269, %v2333
      %v2360 = vadd.f32 %v2270, %v2335
      %v2361 = vadd.f32 %v2271, %v2337
      %v2362 = vadd.f32 %v2272, %v2339
      %v2363 = vadd.f32 %v2273, %v2341
      %v2364 = vadd.f32 %v2274, %v2343
      %v2365 = vadd.f32 %v2275, %v2345
      %v2366 = vadd.f32 %v2276, %v2347
      %v2367 = vadd.f32 %v2277, %v2349
      %vm2368 = vcmask 7168
      %2369 = vst.msk [vmem:[%s167] sm:$0xff] %vm2368, %v2359
      %2370 = vst.msk [vmem:[%s167 + $0x8] sm:$0xff] %vm2368, %v2360
      %2371 = vst.msk [vmem:[%s167 + $0x10] sm:$0xff] %vm2368, %v2361
      %2372 = vst.msk [vmem:[%s167 + $0x18] sm:$0xff] %vm2368, %v2362
      %vm2373 = vcmask 2048
      %2374 = vst.msk [vmem:[%s167 + $0x20] sm:$0x7] %vm2373, %v2363
      %2380 = vrot.lane.b32.xlu0 %v2363, 125
      %v2381 = vpop.permute.xlu0 %2380
      %2382 = vrot.lane.b32.xlu0 %v2364, 125
      %v2383 = vpop.permute.xlu0 %2382
      %2384 = vrot.lane.b32.xlu0 %v2365, 125
      %v2385 = vpop.permute.xlu0 %2384
      %2386 = vrot.lane.b32.xlu0 %v2366, 125
      %v2387 = vpop.permute.xlu0 %2386
      %2388 = vrot.lane.b32.xlu0 %v2367, 125
      %v2389 = vpop.permute.xlu0 %2388
      %vm2395 = vcmask 15371
      %2396 = vst.msk [vmem:[%s167 - $0x3] sm:$0xf8] %vm2395, %v2381
      %vm2397 = vcmask 15368
      %2398 = vst.msk [vmem:[%s167 + $0x5] sm:$0xff] %vm2397, %v2383
      %2399 = vst.msk [vmem:[%s167 + $0xd] sm:$0xff] %vm2397, %v2385
      %2400 = vst.msk [vmem:[%s167 + $0x15] sm:$0xff] %vm2397, %v2387
      %vm2401 = vcmask 13320
      %2402 = vst.msk [vmem:[%s167 + $0x1d] sm:$0x3f] %vm2401, %v2389
      %2403 = vrot.lane.b32.xlu0 %v2363, 123
      %v2404 = vpop.permute.xlu0 %2403
      %2405 = vrot.lane.b32.xlu0 %v2364, 123
      %v2406 = vpop.permute.xlu0 %2405
      %2407 = vrot.lane.b32.xlu0 %v2365, 123
      %v2408 = vpop.permute.xlu0 %2407
      %2409 = vrot.lane.b32.xlu0 %v2366, 123
      %v2410 = vpop.permute.xlu0 %2409
      %2411 = vrot.lane.b32.xlu0 %v2367, 123
      %v2412 = vpop.permute.xlu0 %2411
      %vm2418 = vcmask 23571
      %2419 = vst.msk [vmem:[%s167 - $0x3] sm:$0xf8] %vm2418, %v2404
      %vm2420 = vcmask 23568
      %2421 = vst.msk [vmem:[%s167 + $0x5] sm:$0xff] %vm2420, %v2406
      %2422 = vst.msk [vmem:[%s167 + $0xd] sm:$0xff] %vm2420, %v2408
      %2423 = vst.msk [vmem:[%s167 + $0x15] sm:$0xff] %vm2420, %v2410
      %vm2424 = vcmask 21520
      %2425 = vst.msk [vmem:[%s167 + $0x1d] sm:$0x3f] %vm2424, %v2412
      %2426 = vrot.lane.b32.xlu0 %v2363, 121
      %v2427 = vpop.permute.xlu0 %2426
      %2428 = vrot.lane.b32.xlu0 %v2364, 121
      %v2429 = vpop.permute.xlu0 %2428
      %2430 = vrot.lane.b32.xlu0 %v2365, 121
      %v2431 = vpop.permute.xlu0 %2430
      %2432 = vrot.lane.b32.xlu0 %v2366, 121
      %v2433 = vpop.permute.xlu0 %2432
      %2434 = vrot.lane.b32.xlu0 %v2367, 121
      %v2435 = vpop.permute.xlu0 %2434
      %vm2441 = vcmask 31771
      %2442 = vst.msk [vmem:[%s167 - $0x3] sm:$0xf8] %vm2441, %v2427
      %vm2443 = vcmask 31768
      %2444 = vst.msk [vmem:[%s167 + $0x5] sm:$0xff] %vm2443, %v2429
      %2445 = vst.msk [vmem:[%s167 + $0xd] sm:$0xff] %vm2443, %v2431
      %2446 = vst.msk [vmem:[%s167 + $0x15] sm:$0xff] %vm2443, %v2433
      %vm2447 = vcmask 29720
      %2448 = vst.msk [vmem:[%s167 + $0x1d] sm:$0x3f] %vm2447, %v2435
      %p2449 = scmp.lt.s32.totalorder %s14, 1
      %s2450 = scalar_select %p2449, %s14, 1
      %s2451 = smul.addr %s2450, 5
      %s2452 = smul.addr %s2451, 8
      %s2453 = scalar_lea.vmem %s3, %s2452
      // Predicated region
      $region33: #{tpu_custom_call.1} parent=31 // pred_check
        %p2454 = pneg %p100
      $region34: #{tpu_custom_call.1} parent=31 // pred_check_branch
        %2456 = sbr.rel (%p2454) target = $region36
      $region35: #{tpu_custom_call.1} parent=31 // pred_region
        _
      $region36: #{tpu_custom_call.1} parent=31 // pred_fallthru
        _
    $region32: #{tpu_custom_call.1} parent=5 // pred_fallthru
      _
    %p2457 = scmp.le.s32.totalorder 2, %s9
    // Predicated region
    $region37: #{tpu_custom_call.1} parent=5 // pred_check
      %p2458 = pneg %p2457
    $region38: #{tpu_custom_call.1} parent=5 // pred_check_branch
      %2460 = sbr.rel (%p2458) target = $region40
    $region39: #{tpu_custom_call.1} parent=5 // pred_region
      %s2461 = ssub.s32 %s9, 2
      // Predicated region
      $region41: #{tpu_custom_call.1} parent=39 // pred_check
        %p2462 = pneg %p106
      $region42: #{tpu_custom_call.1} parent=39 // pred_check_branch
        %2464 = sbr.rel (%p2462) target = $region44
      $region43: #{tpu_custom_call.1} parent=39 // pred_region
        %p2465 = scmp.lt.s32.totalorder %s15, 1
        %s2466 = scalar_select %p2465, %s15, 1
        %s2467 = smul.addr %s2466, 5
        %s2468 = smul.addr %s2467, 8
        %s2469 = scalar_lea.vmem %s3, %s2468
      $region44: #{tpu_custom_call.1} parent=39 // pred_fallthru
        _
    $region40: #{tpu_custom_call.1} parent=5 // pred_fallthru
      _
  $region6: #{tpu_custom_call.1} parent=0 // loop_footer
    %s13 = sadd.s32 1, %s9
  $region7: #{tpu_custom_call.1} parent=0 // loop_footer_branch
    %8 = sbr.rel target = $region3
  $region8: #{tpu_custom_call.1} parent=0 // loop_exit
    _

</llo_original>
